<compile_context>
chip_gen: v6e
topology: v6e:2x2x1
jax: 0.10.0
libtpu: 0.0.40
codegen_flags: <defaults>
</compile_context>

<pallas_src>
import math
from functools import partial

import jax
import jax.numpy as jnp
import numpy as np
from jax.experimental import pallas as pl
from jax.experimental.pallas import tpu as pltpu


# --------------------------- kernel 1: QKV projection ------------------------

def _qkv_proj_kernel(x_ref, wq_ref, bq_ref, wk_ref, bk_ref, wv_ref, bv_ref,
                     q_ref, k_ref, v_ref, *, scale):
    """Projects one (tp, C) tile of x into per-head Q (pre-scaled), K, V."""
    x = x_ref[0]                                        # (tp, C), compute dtype
    n_head = q_ref.shape[1]
    # Static unroll over heads: each iteration's results are stored
    # immediately, so vreg live ranges stay bounded for moderate H.
    # TODO(synk): use a fori_loop / head grid axis for very large n_head.
    for h in range(n_head):
        q = jnp.dot(x, wq_ref[h], preferred_element_type=jnp.float32) + bq_ref[h]
        k = jnp.dot(x, wk_ref[h], preferred_element_type=jnp.float32) + bk_ref[h]
        v = jnp.dot(x, wv_ref[h], preferred_element_type=jnp.float32) + bv_ref[h]
        q_ref[0, h] = (q * scale).astype(q_ref.dtype)   # fold 1/sqrt(hd) into q
        k_ref[0, h] = k.astype(k_ref.dtype)
        v_ref[0, h] = v.astype(v_ref.dtype)


# --------------- kernel 2: flash attention + output projection ---------------

def _flash_attn_kernel(q_ref, k_ref, v_ref, wp_ref, bp_ref, o_ref,
                       m_scr, l_scr, acc_scr, out_scr):
    """One grid step = (batch b, query tile qi, head h, kv tile ki)."""
    h = pl.program_id(2)
    ki = pl.program_id(3)
    last_h = pl.num_programs(2) - 1
    last_ki = pl.num_programs(3) - 1

    @pl.when((h == 0) & (ki == 0))
    def _zero_out_acc():
        out_scr[...] = jnp.zeros_like(out_scr)          # (tq, C) f32

    @pl.when(ki == 0)
    def _reset_flash_stats():
        m_scr[...] = jnp.full(m_scr.shape, -jnp.inf, m_scr.dtype)
        l_scr[...] = jnp.zeros_like(l_scr)
        acc_scr[...] = jnp.zeros_like(acc_scr)

    q = q_ref[0, 0]                                     # (tq, hd), pre-scaled
    k = k_ref[0, 0]                                     # (tk, hd)
    # scores (tq, tk) = q @ k^T (contract over head_dim), f32 accumulation.
    s = jax.lax.dot_general(q, k, (((1,), (1,)), ((), ())),
                            preferred_element_type=jnp.float32)

    # online softmax (f32)
    m_prev = m_scr[...]
    m_new = jnp.maximum(m_prev, jnp.max(s, axis=-1, keepdims=True))
    alpha = jnp.exp(m_prev - m_new)
    p = jnp.exp(s - m_new)                              # (tq, tk)
    l_scr[...] = alpha * l_scr[...] + jnp.sum(p, axis=-1, keepdims=True)
    acc_scr[...] = alpha * acc_scr[...] + jnp.dot(
        p.astype(v_ref.dtype), v_ref[0, 0], preferred_element_type=jnp.float32)
    m_scr[...] = m_new

    @pl.when(ki == last_ki)
    def _project_head():
        # Exact reciprocal: runs once per (query tile, head) — negligible.
        y = acc_scr[...] / l_scr[...]                   # (tq, hd) f32
        out_scr[...] += jnp.dot(y.astype(wp_ref.dtype), wp_ref[0],
                                preferred_element_type=jnp.float32)

    @pl.when((h == last_h) & (ki == last_ki))
    def _write_output():
        o_ref[0] = (out_scr[...] + bp_ref[...]).astype(o_ref.dtype)


# --------------------------------- helpers -----------------------------------

def _pick_tile(n, pref):
    """Largest multiple-of-16 divisor of n that is <= pref (fallback: n).

    Multiples of 16 satisfy both f32 (8,128) and bf16 (16,128) sublane tiling;
    a block equal to the full dimension is always legal.
    """
    t = min(n, pref)
    t -= t % 16
    while t >= 16:
        if n % t == 0:
            return t
        t -= 16
    return n


def _round_up(x, m):
    return -(-x // m) * m


def _vmem_limit_bytes(entries):
    """Scoped-VMEM limit derived from the actual buffer set.

    entries = [(shape, dtype, n_buffers)].  Shapes are padded to (8, 128)
    tiling before summing; 2x safety factor + 4 MiB covers Mosaic internal
    scratch.  Floor 32 MiB (above the 16/32 MiB defaults), cap 64 MiB (v7x
    physical VMEM per TensorCore).
    """
    total = 0
    for shape, dtype, bufs in entries:
        s = list(shape)
        if len(s) >= 1:
            s[-1] = _round_up(s[-1], 128)
        if len(s) >= 2:
            s[-2] = _round_up(s[-2], 8)
        total += int(np.prod(s)) * np.dtype(dtype).itemsize * bufs
    return int(min(max(2 * total + (4 << 20), 32 << 20), 64 << 20))


# --------------------------------- wrapper ------------------------------------

def self_attention(x, w_qkv, b_qkv, w_proj, b_proj, *, n_head,
                   q_tile=256, kv_tile=256, compute_dtype=jnp.bfloat16):
    """Fused non-causal self-attention (SelfAttention.forward, eval mode).

    x: (B, T, C); w_qkv: (C, 3C); b_qkv: (1, 3C); w_proj: (C, C); b_proj: (1, C).
    Weights are stored pre-transposed (in_features, out_features).
    """
    B, T, C = x.shape
    assert C % n_head == 0
    hd = C // n_head
    scale = 1.0 / math.sqrt(hd)
    out_dtype = x.dtype

    # ---- operand prep: bf16 MXU operands, f32 biases, head-major weights ----
    xc = x.astype(compute_dtype)
    w_qkv_h = (w_qkv.reshape(C, 3, n_head, hd).transpose(1, 2, 0, 3)
               .astype(compute_dtype))                        # (3, H, C, hd)
    b_qkv_h = b_qkv.reshape(3, n_head, 1, hd).astype(jnp.float32)
    w_q, w_k, w_v = w_qkv_h[0], w_qkv_h[1], w_qkv_h[2]
    b_q, b_k, b_v = b_qkv_h[0], b_qkv_h[1], b_qkv_h[2]
    w_proj_h = w_proj.reshape(n_head, hd, C).astype(compute_dtype)   # (H, hd, C)
    b_proj_f = b_proj.astype(jnp.float32)                            # (1, C)

    tq = _pick_tile(T, q_tile)
    tk = _pick_tile(T, kv_tile)
    tp = tq                                                   # projection tile

    # ------------- kernel 1: QKV projection (once per (B, T) row) ------------
    resident = lambda b, ti: (0, 0, 0)
    # Constant-index operands: single-buffered (double buffering buys nothing
    # for an invariant block and would double its VMEM footprint).
    wspec = lambda shape: pl.BlockSpec(shape, resident,
                                       pipeline_mode=pl.Buffered(1))
    vmem1 = _vmem_limit_bytes([
        ((1, tp, C), compute_dtype, 2),                       # x tile
        ((n_head, C, hd), compute_dtype, 1),                  # W_q
        ((n_head, C, hd), compute_dtype, 1),                  # W_k
        ((n_head, C, hd), compute_dtype, 1),                  # W_v
        ((n_head, 1, hd), jnp.float32, 1),                    # b_q
        ((n_head, 1, hd), jnp.float32, 1),                    # b_k
        ((n_head, 1, hd), jnp.float32, 1),                    # b_v
        ((1, n_head, tp, hd), compute_dtype, 2),              # q out
        ((1, n_head, tp, hd), compute_dtype, 2),              # k out
        ((1, n_head, tp, hd), compute_dtype, 2),              # v out
    ])
    qkv_shape = jax.ShapeDtypeStruct((B, n_head, T, hd), compute_dtype)
    qkv_out_spec = pl.BlockSpec((1, n_head, tp, hd), lambda b, ti: (b, 0, ti, 0))
    q, k, v = pl.pallas_call(
        partial(_qkv_proj_kernel, scale=scale),
        out_shape=(qkv_shape, qkv_shape, qkv_shape),
        grid_spec=pltpu.PrefetchScalarGridSpec(
            num_scalar_prefetch=0,
            grid=(B, T // tp),
            in_specs=[
                pl.BlockSpec((1, tp, C), lambda b, ti: (b, ti, 0)),   # x
                wspec((n_head, C, hd)),                               # W_q
                wspec((n_head, 1, hd)),                               # b_q
                wspec((n_head, C, hd)),                               # W_k
                wspec((n_head, 1, hd)),                               # b_k
                wspec((n_head, C, hd)),                               # W_v
                wspec((n_head, 1, hd)),                               # b_v
            ],
            out_specs=(qkv_out_spec, qkv_out_spec, qkv_out_spec),
        ),
        compiler_params=pltpu.CompilerParams(
            dimension_semantics=("parallel", "parallel"),
            vmem_limit_bytes=vmem1),
    )(xc, w_q, b_q, w_k, b_k, w_v, b_v)

    # ------------- kernel 2: flash attention + output projection -------------
    vmem2 = _vmem_limit_bytes([
        ((1, 1, tq, hd), compute_dtype, 2),                   # q tile
        ((1, 1, tk, hd), compute_dtype, 2),                   # k tile
        ((1, 1, tk, hd), compute_dtype, 2),                   # v tile
        ((1, hd, C), compute_dtype, 2),                       # W_proj head slice
        ((1, C), jnp.float32, 1),                             # b_proj
        ((1, tq, C), out_dtype, 2),                           # output tile
        ((tq, 1), jnp.float32, 1),                            # m scratch
        ((tq, 1), jnp.float32, 1),                            # l scratch
        ((tq, hd), jnp.float32, 1),                           # per-head acc
        ((tq, C), jnp.float32, 1),                            # output accumulator
    ])
    # Grid: batch and q-tile axes are "parallel" (they shard across v7x's two
    # TensorCores — keep B*(T//tq) >= 2); head and kv-tile axes carry the
    # resident output / online-softmax accumulators, so they are "arbitrary".
    out = pl.pallas_call(
        _flash_attn_kernel,
        out_shape=jax.ShapeDtypeStruct((B, T, C), out_dtype),
        grid_spec=pltpu.PrefetchScalarGridSpec(
            num_scalar_prefetch=0,
            grid=(B, T // tq, n_head, T // tk),
            in_specs=[
                pl.BlockSpec((1, 1, tq, hd), lambda b, qi, h, ki: (b, h, qi, 0)),
                pl.BlockSpec((1, 1, tk, hd), lambda b, qi, h, ki: (b, h, ki, 0)),
                pl.BlockSpec((1, 1, tk, hd), lambda b, qi, h, ki: (b, h, ki, 0)),
                pl.BlockSpec((1, hd, C), lambda b, qi, h, ki: (h, 0, 0)),
                pl.BlockSpec((1, C), lambda b, qi, h, ki: (0, 0),
                             pipeline_mode=pl.Buffered(1)),
            ],
            out_specs=pl.BlockSpec((1, tq, C), lambda b, qi, h, ki: (b, qi, 0)),
            scratch_shapes=[
                pltpu.VMEM((tq, 1), jnp.float32),     # running max m
                pltpu.VMEM((tq, 1), jnp.float32),     # running denom l
                pltpu.VMEM((tq, hd), jnp.float32),    # per-head output acc
                pltpu.VMEM((tq, C), jnp.float32),     # projected output acc
            ],
        ),
        compiler_params=pltpu.CompilerParams(
            dimension_semantics=("parallel", "parallel", "arbitrary", "arbitrary"),
            vmem_limit_bytes=vmem2),
    )(q, k, v, w_proj_h, b_proj_f)
    return out


# --------------------------------- testing ------------------------------------

def _reference(x, w_qkv, b_qkv, w_proj, b_proj, n_head):
    B, T, C = x.shape
    hd = C // n_head
    qkv = x @ w_qkv + b_qkv[0]
    q, k, v = qkv[..., :C], qkv[..., C:2 * C], qkv[..., 2 * C:]
    q = q.reshape(B, T, n_head, hd).transpose(0, 2, 1, 3)
    k = k.reshape(B, T, n_head, hd).transpose(0, 2, 1, 3)
    v = v.reshape(B, T, n_head, hd).transpose(0, 2, 1, 3)
    s = jnp.einsum("bhqd,bhkd->bhqk", q, k) / math.sqrt(hd)
    p = jax.nn.softmax(s, axis=-1)
    y = jnp.einsum("bhqk,bhkd->bhqd", p, v)
    y = y.transpose(0, 2, 1, 3).reshape(B, T, C)
    return y @ w_proj + b_proj[0]


def _run_case(B, T, C, n_head, seed=0, **kw):
    key = jax.random.PRNGKey(seed)
    kx, k1, k2, k3, k4 = jax.random.split(key, 5)
    bound = 1.0 / math.sqrt(C)
    x = jax.random.normal(kx, (B, T, C), dtype=jnp.float32)
    w_qkv = jax.random.uniform(k1, (C, 3 * C), jnp.float32, -bound, bound)
    b_qkv = jax.random.uniform(k2, (1, 3 * C), jnp.float32, -bound, bound)
    w_proj = jax.random.uniform(k3, (C, C), jnp.float32, -bound, bound)
    b_proj = jax.random.uniform(k4, (1, C), jnp.float32, -bound, bound)

    y = self_attention(x, w_qkv, b_qkv, w_proj, b_proj, n_head=n_head, **kw)
    y = jax.block_until_ready(y)
    y_ref = _reference(x, w_qkv, b_qkv, w_proj, b_proj, n_head)
    # bf16 MXU operands (f32 accumulation) -> loosened tolerance vs f32 ref.
    np.testing.assert_allclose(np.asarray(y, dtype=np.float32),
                               np.asarray(y_ref, dtype=np.float32),
                               rtol=2e-2, atol=2e-2)


if __name__ == "__main__":
    # config matching the module spec: n_embd=32, n_head=4, dropout=0 (eval)
    _run_case(B=2, T=8, C=32, n_head=4, seed=0)
    # exercise multi-tile online softmax + head grid axis: 2 q-tiles x 2 kv-tiles
    _run_case(B=2, T=256, C=64, n_head=4, seed=1, q_tile=128, kv_tile=128)
    print("KERNEL_OK")
</pallas_src>

<mosaic_0001>
module attributes {stable_mosaic.version = 11 : i64} {
  func.func @_qkv_proj_kernel(%arg0: i32, %arg1: i32, %arg2: memref<1x8x32xbf16, #tpu.memory_space<vmem>>, %arg3: memref<4x32x8xbf16, #tpu.memory_space<vmem>>, %arg4: memref<4x1x8xf32, #tpu.memory_space<vmem>>, %arg5: memref<4x32x8xbf16, #tpu.memory_space<vmem>>, %arg6: memref<4x1x8xf32, #tpu.memory_space<vmem>>, %arg7: memref<4x32x8xbf16, #tpu.memory_space<vmem>>, %arg8: memref<4x1x8xf32, #tpu.memory_space<vmem>>, %arg9: memref<1x4x8x8xbf16, #tpu.memory_space<vmem>>, %arg10: memref<1x4x8x8xbf16, #tpu.memory_space<vmem>>, %arg11: memref<1x4x8x8xbf16, #tpu.memory_space<vmem>>) attributes {dimension_semantics = [#tpu.dimension_semantics<parallel>, #tpu.dimension_semantics<parallel>], iteration_bounds = array<i64: 2, 1>, scalar_prefetch = 0 : i64, scratch_operands = 0 : i64, tpu.core_type = #tpu.core_type<tc>, window_params = [{transform_indices = @transform_0, window_bounds = array<i64: 1, 8, 32>}, {pipeline_mode = #tpu.pipeline_mode<synchronous>, transform_indices = @transform_1, window_bounds = array<i64: 4, 32, 8>}, {pipeline_mode = #tpu.pipeline_mode<synchronous>, transform_indices = @transform_2, window_bounds = array<i64: 4, 1, 8>}, {pipeline_mode = #tpu.pipeline_mode<synchronous>, transform_indices = @transform_3, window_bounds = array<i64: 4, 32, 8>}, {pipeline_mode = #tpu.pipeline_mode<synchronous>, transform_indices = @transform_4, window_bounds = array<i64: 4, 1, 8>}, {pipeline_mode = #tpu.pipeline_mode<synchronous>, transform_indices = @transform_5, window_bounds = array<i64: 4, 32, 8>}, {pipeline_mode = #tpu.pipeline_mode<synchronous>, transform_indices = @transform_6, window_bounds = array<i64: 4, 1, 8>}, {transform_indices = @transform_7, window_bounds = array<i64: 1, 4, 8, 8>}, {transform_indices = @transform_8, window_bounds = array<i64: 1, 4, 8, 8>}, {transform_indices = @transform_9, window_bounds = array<i64: 1, 4, 8, 8>}]} {
    %c0 = arith.constant 0 : index
    %c0_0 = arith.constant 0 : index
    %c0_1 = arith.constant 0 : index
    %0 = vector.load %arg2[%c0, %c0_0, %c0_1] : memref<1x8x32xbf16, #tpu.memory_space<vmem>>, vector<1x8x32xbf16>
    %1 = vector.shape_cast %0 : vector<1x8x32xbf16> to vector<8x32xbf16>
    %c0_2 = arith.constant 0 : index
    %c0_3 = arith.constant 0 : index
    %c0_4 = arith.constant 0 : index
    %2 = vector.load %arg3[%c0_2, %c0_3, %c0_4] : memref<4x32x8xbf16, #tpu.memory_space<vmem>>, vector<1x32x8xbf16>
    %3 = vector.shape_cast %2 : vector<1x32x8xbf16> to vector<32x8xbf16>
    %cst = arith.constant dense<0.000000e+00> : vector<8x8xf32>
    %4 = tpu.matmul %1, %3, %cst {dimension_numbers = #tpu.dot_dimension_numbers<[1], [0], [0], [1], [0, 0, 1, 1], [], []>} : vector<8x32xbf16>, vector<32x8xbf16>, vector<8x8xf32> -> vector<8x8xf32>
    %c0_5 = arith.constant 0 : index
    %c0_6 = arith.constant 0 : index
    %c0_7 = arith.constant 0 : index
    %5 = vector.load %arg4[%c0_5, %c0_6, %c0_7] : memref<4x1x8xf32, #tpu.memory_space<vmem>>, vector<1x1x8xf32>
    %6 = vector.shape_cast %5 : vector<1x1x8xf32> to vector<1x8xf32>
    %7 = vector.broadcast %6 : vector<1x8xf32> to vector<8x8xf32>
    %8 = arith.addf %4, %7 : vector<8x8xf32>
    %c0_8 = arith.constant 0 : index
    %c0_9 = arith.constant 0 : index
    %c0_10 = arith.constant 0 : index
    %9 = vector.load %arg5[%c0_8, %c0_9, %c0_10] : memref<4x32x8xbf16, #tpu.memory_space<vmem>>, vector<1x32x8xbf16>
    %10 = vector.shape_cast %9 : vector<1x32x8xbf16> to vector<32x8xbf16>
    %cst_11 = arith.constant dense<0.000000e+00> : vector<8x8xf32>
    %11 = tpu.matmul %1, %10, %cst_11 {dimension_numbers = #tpu.dot_dimension_numbers<[1], [0], [0], [1], [0, 0, 1, 1], [], []>} : vector<8x32xbf16>, vector<32x8xbf16>, vector<8x8xf32> -> vector<8x8xf32>
    %c0_12 = arith.constant 0 : index
    %c0_13 = arith.constant 0 : index
    %c0_14 = arith.constant 0 : index
    %12 = vector.load %arg6[%c0_12, %c0_13, %c0_14] : memref<4x1x8xf32, #tpu.memory_space<vmem>>, vector<1x1x8xf32>
    %13 = vector.shape_cast %12 : vector<1x1x8xf32> to vector<1x8xf32>
    %14 = vector.broadcast %13 : vector<1x8xf32> to vector<8x8xf32>
    %15 = arith.addf %11, %14 : vector<8x8xf32>
    %c0_15 = arith.constant 0 : index
    %c0_16 = arith.constant 0 : index
    %c0_17 = arith.constant 0 : index
    %16 = vector.load %arg7[%c0_15, %c0_16, %c0_17] : memref<4x32x8xbf16, #tpu.memory_space<vmem>>, vector<1x32x8xbf16>
    %17 = vector.shape_cast %16 : vector<1x32x8xbf16> to vector<32x8xbf16>
    %cst_18 = arith.constant dense<0.000000e+00> : vector<8x8xf32>
    %18 = tpu.matmul %1, %17, %cst_18 {dimension_numbers = #tpu.dot_dimension_numbers<[1], [0], [0], [1], [0, 0, 1, 1], [], []>} : vector<8x32xbf16>, vector<32x8xbf16>, vector<8x8xf32> -> vector<8x8xf32>
    %c0_19 = arith.constant 0 : index
    %c0_20 = arith.constant 0 : index
    %c0_21 = arith.constant 0 : index
    %19 = vector.load %arg8[%c0_19, %c0_20, %c0_21] : memref<4x1x8xf32, #tpu.memory_space<vmem>>, vector<1x1x8xf32>
    %20 = vector.shape_cast %19 : vector<1x1x8xf32> to vector<1x8xf32>
    %21 = vector.broadcast %20 : vector<1x8xf32> to vector<8x8xf32>
    %22 = arith.addf %18, %21 : vector<8x8xf32>
    %cst_22 = arith.constant 0.353553385 : f32
    %23 = vector.broadcast %cst_22 : f32 to vector<8x8xf32>
    %24 = arith.mulf %8, %23 : vector<8x8xf32>
    %25 = arith.truncf %24 : vector<8x8xf32> to vector<8x8xbf16>
    %c0_23 = arith.constant 0 : index
    %c0_24 = arith.constant 0 : index
    %c0_25 = arith.constant 0 : index
    %c0_26 = arith.constant 0 : index
    %26 = vector.load %arg9[%c0_23, %c0_24, %c0_25, %c0_26] : memref<1x4x8x8xbf16, #tpu.memory_space<vmem>>, vector<1x1x8x8xbf16>
    %27 = vector.shape_cast %26 : vector<1x1x8x8xbf16> to vector<8x8xbf16>
    %28 = vector.shape_cast %25 : vector<8x8xbf16> to vector<1x1x8x8xbf16>
    tpu.vector_store %arg9[%c0_23, %c0_24, %c0_25, %c0_26], %28 {strides = array<i32>} : memref<1x4x8x8xbf16, #tpu.memory_space<vmem>>, vector<1x1x8x8xbf16>,
    %29 = arith.truncf %15 : vector<8x8xf32> to vector<8x8xbf16>
    %c0_27 = arith.constant 0 : index
    %c0_28 = arith.constant 0 : index
    %c0_29 = arith.constant 0 : index
    %c0_30 = arith.constant 0 : index
    %30 = vector.load %arg10[%c0_27, %c0_28, %c0_29, %c0_30] : memref<1x4x8x8xbf16, #tpu.memory_space<vmem>>, vector<1x1x8x8xbf16>
    %31 = vector.shape_cast %30 : vector<1x1x8x8xbf16> to vector<8x8xbf16>
    %32 = vector.shape_cast %29 : vector<8x8xbf16> to vector<1x1x8x8xbf16>
    tpu.vector_store %arg10[%c0_27, %c0_28, %c0_29, %c0_30], %32 {strides = array<i32>} : memref<1x4x8x8xbf16, #tpu.memory_space<vmem>>, vector<1x1x8x8xbf16>,
    %33 = arith.truncf %22 : vector<8x8xf32> to vector<8x8xbf16>
    %c0_31 = arith.constant 0 : index
    %c0_32 = arith.constant 0 : index
    %c0_33 = arith.constant 0 : index
    %c0_34 = arith.constant 0 : index
    %34 = vector.load %arg11[%c0_31, %c0_32, %c0_33, %c0_34] : memref<1x4x8x8xbf16, #tpu.memory_space<vmem>>, vector<1x1x8x8xbf16>
    %35 = vector.shape_cast %34 : vector<1x1x8x8xbf16> to vector<8x8xbf16>
    %36 = vector.shape_cast %33 : vector<8x8xbf16> to vector<1x1x8x8xbf16>
    tpu.vector_store %arg11[%c0_31, %c0_32, %c0_33, %c0_34], %36 {strides = array<i32>} : memref<1x4x8x8xbf16, #tpu.memory_space<vmem>>, vector<1x1x8x8xbf16>,
    %c1 = arith.constant 1 : index
    %c0_35 = arith.constant 0 : index
    %c0_36 = arith.constant 0 : index
    %37 = vector.load %arg3[%c1, %c0_35, %c0_36] : memref<4x32x8xbf16, #tpu.memory_space<vmem>>, vector<1x32x8xbf16>
    %38 = vector.shape_cast %37 : vector<1x32x8xbf16> to vector<32x8xbf16>
    %cst_37 = arith.constant dense<0.000000e+00> : vector<8x8xf32>
    %39 = tpu.matmul %1, %38, %cst_37 {dimension_numbers = #tpu.dot_dimension_numbers<[1], [0], [0], [1], [0, 0, 1, 1], [], []>} : vector<8x32xbf16>, vector<32x8xbf16>, vector<8x8xf32> -> vector<8x8xf32>
    %c1_38 = arith.constant 1 : index
    %c0_39 = arith.constant 0 : index
    %c0_40 = arith.constant 0 : index
    %40 = vector.load %arg4[%c1_38, %c0_39, %c0_40] : memref<4x1x8xf32, #tpu.memory_space<vmem>>, vector<1x1x8xf32>
    %41 = vector.shape_cast %40 : vector<1x1x8xf32> to vector<1x8xf32>
    %42 = vector.broadcast %41 : vector<1x8xf32> to vector<8x8xf32>
    %43 = arith.addf %39, %42 : vector<8x8xf32>
    %c1_41 = arith.constant 1 : index
    %c0_42 = arith.constant 0 : index
    %c0_43 = arith.constant 0 : index
    %44 = vector.load %arg5[%c1_41, %c0_42, %c0_43] : memref<4x32x8xbf16, #tpu.memory_space<vmem>>, vector<1x32x8xbf16>
    %45 = vector.shape_cast %44 : vector<1x32x8xbf16> to vector<32x8xbf16>
    %cst_44 = arith.constant dense<0.000000e+00> : vector<8x8xf32>
    %46 = tpu.matmul %1, %45, %cst_44 {dimension_numbers = #tpu.dot_dimension_numbers<[1], [0], [0], [1], [0, 0, 1, 1], [], []>} : vector<8x32xbf16>, vector<32x8xbf16>, vector<8x8xf32> -> vector<8x8xf32>
    %c1_45 = arith.constant 1 : index
    %c0_46 = arith.constant 0 : index
    %c0_47 = arith.constant 0 : index
    %47 = vector.load %arg6[%c1_45, %c0_46, %c0_47] : memref<4x1x8xf32, #tpu.memory_space<vmem>>, vector<1x1x8xf32>
    %48 = vector.shape_cast %47 : vector<1x1x8xf32> to vector<1x8xf32>
    %49 = vector.broadcast %48 : vector<1x8xf32> to vector<8x8xf32>
    %50 = arith.addf %46, %49 : vector<8x8xf32>
    %c1_48 = arith.constant 1 : index
    %c0_49 = arith.constant 0 : index
    %c0_50 = arith.constant 0 : index
    %51 = vector.load %arg7[%c1_48, %c0_49, %c0_50] : memref<4x32x8xbf16, #tpu.memory_space<vmem>>, vector<1x32x8xbf16>
    %52 = vector.shape_cast %51 : vector<1x32x8xbf16> to vector<32x8xbf16>
    %cst_51 = arith.constant dense<0.000000e+00> : vector<8x8xf32>
    %53 = tpu.matmul %1, %52, %cst_51 {dimension_numbers = #tpu.dot_dimension_numbers<[1], [0], [0], [1], [0, 0, 1, 1], [], []>} : vector<8x32xbf16>, vector<32x8xbf16>, vector<8x8xf32> -> vector<8x8xf32>
    %c1_52 = arith.constant 1 : index
    %c0_53 = arith.constant 0 : index
    %c0_54 = arith.constant 0 : index
    %54 = vector.load %arg8[%c1_52, %c0_53, %c0_54] : memref<4x1x8xf32, #tpu.memory_space<vmem>>, vector<1x1x8xf32>
    %55 = vector.shape_cast %54 : vector<1x1x8xf32> to vector<1x8xf32>
    %56 = vector.broadcast %55 : vector<1x8xf32> to vector<8x8xf32>
    %57 = arith.addf %53, %56 : vector<8x8xf32>
    %cst_55 = arith.constant 0.353553385 : f32
    %58 = vector.broadcast %cst_55 : f32 to vector<8x8xf32>
    %59 = arith.mulf %43, %58 : vector<8x8xf32>
    %60 = arith.truncf %59 : vector<8x8xf32> to vector<8x8xbf16>
    %c0_56 = arith.constant 0 : index
    %c1_57 = arith.constant 1 : index
    %c0_58 = arith.constant 0 : index
    %c0_59 = arith.constant 0 : index
    %61 = vector.load %arg9[%c0_56, %c1_57, %c0_58, %c0_59] : memref<1x4x8x8xbf16, #tpu.memory_space<vmem>>, vector<1x1x8x8xbf16>
    %62 = vector.shape_cast %61 : vector<1x1x8x8xbf16> to vector<8x8xbf16>
    %63 = vector.shape_cast %60 : vector<8x8xbf16> to vector<1x1x8x8xbf16>
    tpu.vector_store %arg9[%c0_56, %c1_57, %c0_58, %c0_59], %63 {strides = array<i32>} : memref<1x4x8x8xbf16, #tpu.memory_space<vmem>>, vector<1x1x8x8xbf16>,
    %64 = arith.truncf %50 : vector<8x8xf32> to vector<8x8xbf16>
    %c0_60 = arith.constant 0 : index
    %c1_61 = arith.constant 1 : index
    %c0_62 = arith.constant 0 : index
    %c0_63 = arith.constant 0 : index
    %65 = vector.load %arg10[%c0_60, %c1_61, %c0_62, %c0_63] : memref<1x4x8x8xbf16, #tpu.memory_space<vmem>>, vector<1x1x8x8xbf16>
    %66 = vector.shape_cast %65 : vector<1x1x8x8xbf16> to vector<8x8xbf16>
    %67 = vector.shape_cast %64 : vector<8x8xbf16> to vector<1x1x8x8xbf16>
    tpu.vector_store %arg10[%c0_60, %c1_61, %c0_62, %c0_63], %67 {strides = array<i32>} : memref<1x4x8x8xbf16, #tpu.memory_space<vmem>>, vector<1x1x8x8xbf16>,
    %68 = arith.truncf %57 : vector<8x8xf32> to vector<8x8xbf16>
    %c0_64 = arith.constant 0 : index
    %c1_65 = arith.constant 1 : index
    %c0_66 = arith.constant 0 : index
    %c0_67 = arith.constant 0 : index
    %69 = vector.load %arg11[%c0_64, %c1_65, %c0_66, %c0_67] : memref<1x4x8x8xbf16, #tpu.memory_space<vmem>>, vector<1x1x8x8xbf16>
    %70 = vector.shape_cast %69 : vector<1x1x8x8xbf16> to vector<8x8xbf16>
    %71 = vector.shape_cast %68 : vector<8x8xbf16> to vector<1x1x8x8xbf16>
    tpu.vector_store %arg11[%c0_64, %c1_65, %c0_66, %c0_67], %71 {strides = array<i32>} : memref<1x4x8x8xbf16, #tpu.memory_space<vmem>>, vector<1x1x8x8xbf16>,
    %c2 = arith.constant 2 : index
    %c0_68 = arith.constant 0 : index
    %c0_69 = arith.constant 0 : index
    %72 = vector.load %arg3[%c2, %c0_68, %c0_69] : memref<4x32x8xbf16, #tpu.memory_space<vmem>>, vector<1x32x8xbf16>
    %73 = vector.shape_cast %72 : vector<1x32x8xbf16> to vector<32x8xbf16>
    %cst_70 = arith.constant dense<0.000000e+00> : vector<8x8xf32>
    %74 = tpu.matmul %1, %73, %cst_70 {dimension_numbers = #tpu.dot_dimension_numbers<[1], [0], [0], [1], [0, 0, 1, 1], [], []>} : vector<8x32xbf16>, vector<32x8xbf16>, vector<8x8xf32> -> vector<8x8xf32>
    %c2_71 = arith.constant 2 : index
    %c0_72 = arith.constant 0 : index
    %c0_73 = arith.constant 0 : index
    %75 = vector.load %arg4[%c2_71, %c0_72, %c0_73] : memref<4x1x8xf32, #tpu.memory_space<vmem>>, vector<1x1x8xf32>
    %76 = vector.shape_cast %75 : vector<1x1x8xf32> to vector<1x8xf32>
    %77 = vector.broadcast %76 : vector<1x8xf32> to vector<8x8xf32>
    %78 = arith.addf %74, %77 : vector<8x8xf32>
    %c2_74 = arith.constant 2 : index
    %c0_75 = arith.constant 0 : index
    %c0_76 = arith.constant 0 : index
    %79 = vector.load %arg5[%c2_74, %c0_75, %c0_76] : memref<4x32x8xbf16, #tpu.memory_space<vmem>>, vector<1x32x8xbf16>
    %80 = vector.shape_cast %79 : vector<1x32x8xbf16> to vector<32x8xbf16>
    %cst_77 = arith.constant dense<0.000000e+00> : vector<8x8xf32>
    %81 = tpu.matmul %1, %80, %cst_77 {dimension_numbers = #tpu.dot_dimension_numbers<[1], [0], [0], [1], [0, 0, 1, 1], [], []>} : vector<8x32xbf16>, vector<32x8xbf16>, vector<8x8xf32> -> vector<8x8xf32>
    %c2_78 = arith.constant 2 : index
    %c0_79 = arith.constant 0 : index
    %c0_80 = arith.constant 0 : index
    %82 = vector.load %arg6[%c2_78, %c0_79, %c0_80] : memref<4x1x8xf32, #tpu.memory_space<vmem>>, vector<1x1x8xf32>
    %83 = vector.shape_cast %82 : vector<1x1x8xf32> to vector<1x8xf32>
    %84 = vector.broadcast %83 : vector<1x8xf32> to vector<8x8xf32>
    %85 = arith.addf %81, %84 : vector<8x8xf32>
    %c2_81 = arith.constant 2 : index
    %c0_82 = arith.constant 0 : index
    %c0_83 = arith.constant 0 : index
    %86 = vector.load %arg7[%c2_81, %c0_82, %c0_83] : memref<4x32x8xbf16, #tpu.memory_space<vmem>>, vector<1x32x8xbf16>
    %87 = vector.shape_cast %86 : vector<1x32x8xbf16> to vector<32x8xbf16>
    %cst_84 = arith.constant dense<0.000000e+00> : vector<8x8xf32>
    %88 = tpu.matmul %1, %87, %cst_84 {dimension_numbers = #tpu.dot_dimension_numbers<[1], [0], [0], [1], [0, 0, 1, 1], [], []>} : vector<8x32xbf16>, vector<32x8xbf16>, vector<8x8xf32> -> vector<8x8xf32>
    %c2_85 = arith.constant 2 : index
    %c0_86 = arith.constant 0 : index
    %c0_87 = arith.constant 0 : index
    %89 = vector.load %arg8[%c2_85, %c0_86, %c0_87] : memref<4x1x8xf32, #tpu.memory_space<vmem>>, vector<1x1x8xf32>
    %90 = vector.shape_cast %89 : vector<1x1x8xf32> to vector<1x8xf32>
    %91 = vector.broadcast %90 : vector<1x8xf32> to vector<8x8xf32>
    %92 = arith.addf %88, %91 : vector<8x8xf32>
    %cst_88 = arith.constant 0.353553385 : f32
    %93 = vector.broadcast %cst_88 : f32 to vector<8x8xf32>
    %94 = arith.mulf %78, %93 : vector<8x8xf32>
    %95 = arith.truncf %94 : vector<8x8xf32> to vector<8x8xbf16>
    %c0_89 = arith.constant 0 : index
    %c2_90 = arith.constant 2 : index
    %c0_91 = arith.constant 0 : index
    %c0_92 = arith.constant 0 : index
    %96 = vector.load %arg9[%c0_89, %c2_90, %c0_91, %c0_92] : memref<1x4x8x8xbf16, #tpu.memory_space<vmem>>, vector<1x1x8x8xbf16>
    %97 = vector.shape_cast %96 : vector<1x1x8x8xbf16> to vector<8x8xbf16>
    %98 = vector.shape_cast %95 : vector<8x8xbf16> to vector<1x1x8x8xbf16>
    tpu.vector_store %arg9[%c0_89, %c2_90, %c0_91, %c0_92], %98 {strides = array<i32>} : memref<1x4x8x8xbf16, #tpu.memory_space<vmem>>, vector<1x1x8x8xbf16>,
    %99 = arith.truncf %85 : vector<8x8xf32> to vector<8x8xbf16>
    %c0_93 = arith.constant 0 : index
    %c2_94 = arith.constant 2 : index
    %c0_95 = arith.constant 0 : index
    %c0_96 = arith.constant 0 : index
    %100 = vector.load %arg10[%c0_93, %c2_94, %c0_95, %c0_96] : memref<1x4x8x8xbf16, #tpu.memory_space<vmem>>, vector<1x1x8x8xbf16>
    %101 = vector.shape_cast %100 : vector<1x1x8x8xbf16> to vector<8x8xbf16>
    %102 = vector.shape_cast %99 : vector<8x8xbf16> to vector<1x1x8x8xbf16>
    tpu.vector_store %arg10[%c0_93, %c2_94, %c0_95, %c0_96], %102 {strides = array<i32>} : memref<1x4x8x8xbf16, #tpu.memory_space<vmem>>, vector<1x1x8x8xbf16>,
    %103 = arith.truncf %92 : vector<8x8xf32> to vector<8x8xbf16>
    %c0_97 = arith.constant 0 : index
    %c2_98 = arith.constant 2 : index
    %c0_99 = arith.constant 0 : index
    %c0_100 = arith.constant 0 : index
    %104 = vector.load %arg11[%c0_97, %c2_98, %c0_99, %c0_100] : memref<1x4x8x8xbf16, #tpu.memory_space<vmem>>, vector<1x1x8x8xbf16>
    %105 = vector.shape_cast %104 : vector<1x1x8x8xbf16> to vector<8x8xbf16>
    %106 = vector.shape_cast %103 : vector<8x8xbf16> to vector<1x1x8x8xbf16>
    tpu.vector_store %arg11[%c0_97, %c2_98, %c0_99, %c0_100], %106 {strides = array<i32>} : memref<1x4x8x8xbf16, #tpu.memory_space<vmem>>, vector<1x1x8x8xbf16>,
    %c3 = arith.constant 3 : index
    %c0_101 = arith.constant 0 : index
    %c0_102 = arith.constant 0 : index
    %107 = vector.load %arg3[%c3, %c0_101, %c0_102] : memref<4x32x8xbf16, #tpu.memory_space<vmem>>, vector<1x32x8xbf16>
    %108 = vector.shape_cast %107 : vector<1x32x8xbf16> to vector<32x8xbf16>
    %cst_103 = arith.constant dense<0.000000e+00> : vector<8x8xf32>
    %109 = tpu.matmul %1, %108, %cst_103 {dimension_numbers = #tpu.dot_dimension_numbers<[1], [0], [0], [1], [0, 0, 1, 1], [], []>} : vector<8x32xbf16>, vector<32x8xbf16>, vector<8x8xf32> -> vector<8x8xf32>
    %c3_104 = arith.constant 3 : index
    %c0_105 = arith.constant 0 : index
    %c0_106 = arith.constant 0 : index
    %110 = vector.load %arg4[%c3_104, %c0_105, %c0_106] : memref<4x1x8xf32, #tpu.memory_space<vmem>>, vector<1x1x8xf32>
    %111 = vector.shape_cast %110 : vector<1x1x8xf32> to vector<1x8xf32>
    %112 = vector.broadcast %111 : vector<1x8xf32> to vector<8x8xf32>
    %113 = arith.addf %109, %112 : vector<8x8xf32>
    %c3_107 = arith.constant 3 : index
    %c0_108 = arith.constant 0 : index
    %c0_109 = arith.constant 0 : index
    %114 = vector.load %arg5[%c3_107, %c0_108, %c0_109] : memref<4x32x8xbf16, #tpu.memory_space<vmem>>, vector<1x32x8xbf16>
    %115 = vector.shape_cast %114 : vector<1x32x8xbf16> to vector<32x8xbf16>
    %cst_110 = arith.constant dense<0.000000e+00> : vector<8x8xf32>
    %116 = tpu.matmul %1, %115, %cst_110 {dimension_numbers = #tpu.dot_dimension_numbers<[1], [0], [0], [1], [0, 0, 1, 1], [], []>} : vector<8x32xbf16>, vector<32x8xbf16>, vector<8x8xf32> -> vector<8x8xf32>
    %c3_111 = arith.constant 3 : index
    %c0_112 = arith.constant 0 : index
    %c0_113 = arith.constant 0 : index
    %117 = vector.load %arg6[%c3_111, %c0_112, %c0_113] : memref<4x1x8xf32, #tpu.memory_space<vmem>>, vector<1x1x8xf32>
    %118 = vector.shape_cast %117 : vector<1x1x8xf32> to vector<1x8xf32>
    %119 = vector.broadcast %118 : vector<1x8xf32> to vector<8x8xf32>
    %120 = arith.addf %116, %119 : vector<8x8xf32>
    %c3_114 = arith.constant 3 : index
    %c0_115 = arith.constant 0 : index
    %c0_116 = arith.constant 0 : index
    %121 = vector.load %arg7[%c3_114, %c0_115, %c0_116] : memref<4x32x8xbf16, #tpu.memory_space<vmem>>, vector<1x32x8xbf16>
    %122 = vector.shape_cast %121 : vector<1x32x8xbf16> to vector<32x8xbf16>
    %cst_117 = arith.constant dense<0.000000e+00> : vector<8x8xf32>
    %123 = tpu.matmul %1, %122, %cst_117 {dimension_numbers = #tpu.dot_dimension_numbers<[1], [0], [0], [1], [0, 0, 1, 1], [], []>} : vector<8x32xbf16>, vector<32x8xbf16>, vector<8x8xf32> -> vector<8x8xf32>
    %c3_118 = arith.constant 3 : index
    %c0_119 = arith.constant 0 : index
    %c0_120 = arith.constant 0 : index
    %124 = vector.load %arg8[%c3_118, %c0_119, %c0_120] : memref<4x1x8xf32, #tpu.memory_space<vmem>>, vector<1x1x8xf32>
    %125 = vector.shape_cast %124 : vector<1x1x8xf32> to vector<1x8xf32>
    %126 = vector.broadcast %125 : vector<1x8xf32> to vector<8x8xf32>
    %127 = arith.addf %123, %126 : vector<8x8xf32>
    %cst_121 = arith.constant 0.353553385 : f32
    %128 = vector.broadcast %cst_121 : f32 to vector<8x8xf32>
    %129 = arith.mulf %113, %128 : vector<8x8xf32>
    %130 = arith.truncf %129 : vector<8x8xf32> to vector<8x8xbf16>
    %c0_122 = arith.constant 0 : index
    %c3_123 = arith.constant 3 : index
    %c0_124 = arith.constant 0 : index
    %c0_125 = arith.constant 0 : index
    %131 = vector.load %arg9[%c0_122, %c3_123, %c0_124, %c0_125] : memref<1x4x8x8xbf16, #tpu.memory_space<vmem>>, vector<1x1x8x8xbf16>
    %132 = vector.shape_cast %131 : vector<1x1x8x8xbf16> to vector<8x8xbf16>
    %133 = vector.shape_cast %130 : vector<8x8xbf16> to vector<1x1x8x8xbf16>
    tpu.vector_store %arg9[%c0_122, %c3_123, %c0_124, %c0_125], %133 {strides = array<i32>} : memref<1x4x8x8xbf16, #tpu.memory_space<vmem>>, vector<1x1x8x8xbf16>,
    %134 = arith.truncf %120 : vector<8x8xf32> to vector<8x8xbf16>
    %c0_126 = arith.constant 0 : index
    %c3_127 = arith.constant 3 : index
    %c0_128 = arith.constant 0 : index
    %c0_129 = arith.constant 0 : index
    %135 = vector.load %arg10[%c0_126, %c3_127, %c0_128, %c0_129] : memref<1x4x8x8xbf16, #tpu.memory_space<vmem>>, vector<1x1x8x8xbf16>
    %136 = vector.shape_cast %135 : vector<1x1x8x8xbf16> to vector<8x8xbf16>
    %137 = vector.shape_cast %134 : vector<8x8xbf16> to vector<1x1x8x8xbf16>
    tpu.vector_store %arg10[%c0_126, %c3_127, %c0_128, %c0_129], %137 {strides = array<i32>} : memref<1x4x8x8xbf16, #tpu.memory_space<vmem>>, vector<1x1x8x8xbf16>,
    %138 = arith.truncf %127 : vector<8x8xf32> to vector<8x8xbf16>
    %c0_130 = arith.constant 0 : index
    %c3_131 = arith.constant 3 : index
    %c0_132 = arith.constant 0 : index
    %c0_133 = arith.constant 0 : index
    %139 = vector.load %arg11[%c0_130, %c3_131, %c0_132, %c0_133] : memref<1x4x8x8xbf16, #tpu.memory_space<vmem>>, vector<1x1x8x8xbf16>
    %140 = vector.shape_cast %139 : vector<1x1x8x8xbf16> to vector<8x8xbf16>
    %141 = vector.shape_cast %138 : vector<8x8xbf16> to vector<1x1x8x8xbf16>
    tpu.vector_store %arg11[%c0_130, %c3_131, %c0_132, %c0_133], %141 {strides = array<i32>} : memref<1x4x8x8xbf16, #tpu.memory_space<vmem>>, vector<1x1x8x8xbf16>,
    return
  }
  func.func @transform_0(%arg0: i32, %arg1: i32) -> (i32, i32, i32) {
    %c0_i32 = arith.constant 0 : i32
    %c0_i32_0 = arith.constant 0 : i32
    return %arg0, %arg1, %c0_i32 : i32, i32, i32
  }
  func.func @transform_1(%arg0: i32, %arg1: i32) -> (i32, i32, i32) {
    %c0_i32 = arith.constant 0 : i32
    %c0_i32_0 = arith.constant 0 : i32
    %c0_i32_1 = arith.constant 0 : i32
    %c0_i32_2 = arith.constant 0 : i32
    return %c0_i32, %c0_i32_0, %c0_i32_1 : i32, i32, i32
  }
  func.func @transform_2(%arg0: i32, %arg1: i32) -> (i32, i32, i32) {
    %c0_i32 = arith.constant 0 : i32
    %c0_i32_0 = arith.constant 0 : i32
    %c0_i32_1 = arith.constant 0 : i32
    %c0_i32_2 = arith.constant 0 : i32
    return %c0_i32, %c0_i32_0, %c0_i32_1 : i32, i32, i32
  }
  func.func @transform_3(%arg0: i32, %arg1: i32) -> (i32, i32, i32) {
    %c0_i32 = arith.constant 0 : i32
    %c0_i32_0 = arith.constant 0 : i32
    %c0_i32_1 = arith.constant 0 : i32
    %c0_i32_2 = arith.constant 0 : i32
    return %c0_i32, %c0_i32_0, %c0_i32_1 : i32, i32, i32
  }
  func.func @transform_4(%arg0: i32, %arg1: i32) -> (i32, i32, i32) {
    %c0_i32 = arith.constant 0 : i32
    %c0_i32_0 = arith.constant 0 : i32
    %c0_i32_1 = arith.constant 0 : i32
    %c0_i32_2 = arith.constant 0 : i32
    return %c0_i32, %c0_i32_0, %c0_i32_1 : i32, i32, i32
  }
  func.func @transform_5(%arg0: i32, %arg1: i32) -> (i32, i32, i32) {
    %c0_i32 = arith.constant 0 : i32
    %c0_i32_0 = arith.constant 0 : i32
    %c0_i32_1 = arith.constant 0 : i32
    %c0_i32_2 = arith.constant 0 : i32
    return %c0_i32, %c0_i32_0, %c0_i32_1 : i32, i32, i32
  }
  func.func @transform_6(%arg0: i32, %arg1: i32) -> (i32, i32, i32) {
    %c0_i32 = arith.constant 0 : i32
    %c0_i32_0 = arith.constant 0 : i32
    %c0_i32_1 = arith.constant 0 : i32
    %c0_i32_2 = arith.constant 0 : i32
    return %c0_i32, %c0_i32_0, %c0_i32_1 : i32, i32, i32
  }
  func.func @transform_7(%arg0: i32, %arg1: i32) -> (i32, i32, i32, i32) {
    %c0_i32 = arith.constant 0 : i32
    %c0_i32_0 = arith.constant 0 : i32
    %c0_i32_1 = arith.constant 0 : i32
    return %arg0, %c0_i32, %arg1, %c0_i32_0 : i32, i32, i32, i32
  }
  func.func @transform_8(%arg0: i32, %arg1: i32) -> (i32, i32, i32, i32) {
    %c0_i32 = arith.constant 0 : i32
    %c0_i32_0 = arith.constant 0 : i32
    %c0_i32_1 = arith.constant 0 : i32
    return %arg0, %c0_i32, %arg1, %c0_i32_0 : i32, i32, i32, i32
  }
  func.func @transform_9(%arg0: i32, %arg1: i32) -> (i32, i32, i32, i32) {
    %c0_i32 = arith.constant 0 : i32
    %c0_i32_0 = arith.constant 0 : i32
    %c0_i32_1 = arith.constant 0 : i32
    return %arg0, %c0_i32, %arg1, %c0_i32_0 : i32, i32, i32, i32
  }
}

</mosaic_0001>

<llo_original>
// kernel: tpu_custom_call.1
$region0: #{tpu_custom_call.1}
  #allocation0 [shape = 'u32[]', space=smem, size = 0x4, offset = 0x4, fixed_abs, tag = 'smem constant byte address 0x4 - core index']
  #allocation1 [shape = 'u32[144,128]{1,0:T(1,128)}', space=vmem, size = 0x12000, scoped, tag = 'internal scratch']
  %s0 = inlined_call_operand.vmem [shape: bf16[2,8,32], index: 0, kind: input, shape index: {}]
  %s1 = inlined_call_operand.vmem [shape: bf16[4,32,8], index: 1, kind: input, shape index: {}]
  %s2 = inlined_call_operand.vmem [shape: f32[4,1,8], index: 2, kind: input, shape index: {}]
  %s3 = inlined_call_operand.vmem [shape: bf16[4,32,8], index: 3, kind: input, shape index: {}]
  %s4 = inlined_call_operand.vmem [shape: f32[4,1,8], index: 4, kind: input, shape index: {}]
  %s5 = inlined_call_operand.vmem [shape: bf16[4,32,8], index: 5, kind: input, shape index: {}]
  %s6 = inlined_call_operand.vmem [shape: f32[4,1,8], index: 6, kind: input, shape index: {}]
  %s7 = inlined_call_operand.hbm [shape: bf16[2,4,8,8], index: 7, kind: output, shape index: {0}]
  %s8 = inlined_call_operand.hbm [shape: bf16[2,4,8,8], index: 8, kind: output, shape index: {1}]
  %s9 = inlined_call_operand.hbm [shape: bf16[2,4,8,8], index: 9, kind: output, shape index: {2}]
  %10 = xla_tuple %s7, %s8, %s9
  %s11 = sld [smem:[#allocation0]]
  $region77: #{tpu_custom_call.1} parent=0
    _
  %s13 = ssub.s32 1, %s11
  %s14 = scalar_select 0, %s13, %s11
  $region1: #{tpu_custom_call.1} parent=0
    #allocation2 [shape = 'u8[16384]{0}', space=vmem, size = 0x4000, scoped, tag = 'output window, operand 0']
    #allocation3 [shape = 's32[2]{0}', space=sflag, size = 0x8, scoped, tag = 'scoped memory for tpu_custom_call.1']
    #allocation4 [shape = 'u8[16384]{0}', space=vmem, size = 0x4000, scoped, tag = 'output window, operand 1']
    #allocation5 [shape = 's32[2]{0}', space=sflag, size = 0x8, scoped, tag = 'scoped memory for tpu_custom_call.1']
    #allocation6 [shape = 'u8[16384]{0}', space=vmem, size = 0x4000, scoped, tag = 'output window, operand 2']
    %15 = vsyncpa [#allocation3], 0
    %s16 = scalar_lea.sflag [#allocation3], 1
    %17 = vsyncpa %s16, 0
    %18 = vsyncpa [#allocation5], 0
    %s19 = scalar_lea.sflag [#allocation5], 1
    %20 = vsyncpa %s19, 0
    loop: start=0, step=1, limit=4
    $region2: #{tpu_custom_call.1} parent=1 // loop_pre_header
      _
    $region3: #{tpu_custom_call.1} parent=1 // loop_header
      %s22 = sphi 0, %s26
      %p23 = scmp.ge.s32.totalorder %s22, 4
      %s29 = sphi 0, %s41
      %s30 = sphi 0, %s37
      %s31 = sphi 0, %s29
      %s32 = sphi 0, %s30
      %s33 = sphi 0, %s31
      %s34 = sphi 0, %s32
      %s46 = sphi 0, %s48
      %s49 = sphi 0, %s46
      %s50 = sphi 0, %s49
      %s66 = sphi 0, %s50
      %s70 = sphi 0, %s70
      %s72 = sphi 0, %s70
      %s73 = sphi 0, %s72
      %s87 = sphi 0, %s73
      %s91 = sphi 0, %s91
      %s93 = sphi 0, %s91
      %s94 = sphi 0, %s93
      %s108 = sphi 0, %s94
      %s112 = sphi 0, %s112
      %s114 = sphi 0, %s112
      %s115 = sphi 0, %s114
      %s129 = sphi 0, %s115
      %s133 = sphi 0, %s133
      %s135 = sphi 0, %s133
      %s136 = sphi 0, %s135
      %s150 = sphi 0, %s136
      %s154 = sphi 0, %s154
      %s156 = sphi 0, %s154
      %s157 = sphi 0, %s156
      %s171 = sphi 0, %s157
      %s175 = sphi 0, %s175
      %s177 = sphi 0, %s175
      %s178 = sphi 0, %s177
      %s192 = sphi 0, %s178
      %s200 = sphi 0, %s202
      %s203 = sphi 0, %s200
      %s204 = sphi 0, %s203
      %s220 = sphi 0, %s204
      %s228 = sphi 0, %s230
      %s231 = sphi 0, %s228
      %s232 = sphi 0, %s231
      %s248 = sphi 0, %s232
      %s256 = sphi 0, %s258
      %s259 = sphi 0, %s256
      %s260 = sphi 0, %s259
      %s276 = sphi 0, %s260
    $region4: #{tpu_custom_call.1} parent=1 // loop_header_branch
      %25 = sbr.rel (%p23) target = $region8
    $region5: #{tpu_custom_call.1} parent=1 // loop_body
      %s27 = ssub.s32 %s22, 1
      %s28 = ssub.s32 %s22, 2
      %s35 = sadd.s32 1, %s30
      %p36 = scmp.ge.s32.totalorder %s35, 1
      %s37 = scalar_select %p36, 0, %s35
      %s38 = sadd.s32 1, %s29
      %s39 = scalar_select %p36, %s38, %s29
      %p40 = scmp.ge.s32.totalorder %s39, 2
      %s41 = scalar_select %p40, 0, %s39
      %s42 = ssub.s32 %s29, %s41
      %s43 = ssub.s32 %s30, %s37
      %s44 = sor.u32 %s42, %s43
      %p45 = scmp.eq.s32.totalorder %s44, 0
      %s47 = sadd.s32 %s46, 1
      %s48 = scalar_select %p45, %s46, %s47
      %p51 = pneg %p45
      %p52 = scmp.eq.s32.totalorder %s22, 1
      %p53 = por %p51, %p52
      %p54 = scmp.ne.s32.totalorder %s46, %s49
      %p55 = scmp.eq.s32.totalorder %s22, 0
      %p56 = por %p54, %p55
      %p57 = scmp.ne.s32.totalorder %s46, %s49
      %p58 = scmp.eq.s32.totalorder %s27, 1
      %p59 = por %p57, %p58
      %p60 = scmp.ne.s32.totalorder %s49, %s50
      %p61 = scmp.eq.s32.totalorder %s27, 0
      %p62 = por %p60, %p61
      %p63 = scmp.ne.s32.totalorder %s49, %s50
      %p64 = scmp.eq.s32.totalorder %s28, 1
      %p65 = por %p63, %p64
      %p67 = scmp.ne.s32.totalorder %s50, %s66
      %p68 = scmp.eq.s32.totalorder %s28, 0
      %p69 = por %p67, %p68
      %s71 = sadd.s32 %s70, 1
      %p74 = scmp.eq.s32.totalorder %s22, 1
      %p75 = scmp.ne.s32.totalorder %s70, %s72
      %p76 = scmp.eq.s32.totalorder %s22, 0
      %p77 = por %p75, %p76
      %p78 = scmp.ne.s32.totalorder %s70, %s72
      %p79 = scmp.eq.s32.totalorder %s27, 1
      %p80 = por %p78, %p79
      %p81 = scmp.ne.s32.totalorder %s72, %s73
      %p82 = scmp.eq.s32.totalorder %s27, 0
      %p83 = por %p81, %p82
      %p84 = scmp.ne.s32.totalorder %s72, %s73
      %p85 = scmp.eq.s32.totalorder %s28, 1
      %p86 = por %p84, %p85
      %p88 = scmp.ne.s32.totalorder %s73, %s87
      %p89 = scmp.eq.s32.totalorder %s28, 0
      %p90 = por %p88, %p89
      %s92 = sadd.s32 %s91, 1
      %p95 = scmp.eq.s32.totalorder %s22, 1
      %p96 = scmp.ne.s32.totalorder %s91, %s93
      %p97 = scmp.eq.s32.totalorder %s22, 0
      %p98 = por %p96, %p97
      %p99 = scmp.ne.s32.totalorder %s91, %s93
      %p100 = scmp.eq.s32.totalorder %s27, 1
      %p101 = por %p99, %p100
      %p102 = scmp.ne.s32.totalorder %s93, %s94
      %p103 = scmp.eq.s32.totalorder %s27, 0
      %p104 = por %p102, %p103
      %p105 = scmp.ne.s32.totalorder %s93, %s94
      %p106 = scmp.eq.s32.totalorder %s28, 1
      %p107 = por %p105, %p106
      %p109 = scmp.ne.s32.totalorder %s94, %s108
      %p110 = scmp.eq.s32.totalorder %s28, 0
      %p111 = por %p109, %p110
      %s113 = sadd.s32 %s112, 1
      %p116 = scmp.eq.s32.totalorder %s22, 1
      %p117 = scmp.ne.s32.totalorder %s112, %s114
      %p118 = scmp.eq.s32.totalorder %s22, 0
      %p119 = por %p117, %p118
      %p120 = scmp.ne.s32.totalorder %s112, %s114
      %p121 = scmp.eq.s32.totalorder %s27, 1
      %p122 = por %p120, %p121
      %p123 = scmp.ne.s32.totalorder %s114, %s115
      %p124 = scmp.eq.s32.totalorder %s27, 0
      %p125 = por %p123, %p124
      %p126 = scmp.ne.s32.totalorder %s114, %s115
      %p127 = scmp.eq.s32.totalorder %s28, 1
      %p128 = por %p126, %p127
      %p130 = scmp.ne.s32.totalorder %s115, %s129
      %p131 = scmp.eq.s32.totalorder %s28, 0
      %p132 = por %p130, %p131
      %s134 = sadd.s32 %s133, 1
      %p137 = scmp.eq.s32.totalorder %s22, 1
      %p138 = scmp.ne.s32.totalorder %s133, %s135
      %p139 = scmp.eq.s32.totalorder %s22, 0
      %p140 = por %p138, %p139
      %p141 = scmp.ne.s32.totalorder %s133, %s135
      %p142 = scmp.eq.s32.totalorder %s27, 1
      %p143 = por %p141, %p142
      %p144 = scmp.ne.s32.totalorder %s135, %s136
      %p145 = scmp.eq.s32.totalorder %s27, 0
      %p146 = por %p144, %p145
      %p147 = scmp.ne.s32.totalorder %s135, %s136
      %p148 = scmp.eq.s32.totalorder %s28, 1
      %p149 = por %p147, %p148
      %p151 = scmp.ne.s32.totalorder %s136, %s150
      %p152 = scmp.eq.s32.totalorder %s28, 0
      %p153 = por %p151, %p152
      %s155 = sadd.s32 %s154, 1
      %p158 = scmp.eq.s32.totalorder %s22, 1
      %p159 = scmp.ne.s32.totalorder %s154, %s156
      %p160 = scmp.eq.s32.totalorder %s22, 0
      %p161 = por %p159, %p160
      %p162 = scmp.ne.s32.totalorder %s154, %s156
      %p163 = scmp.eq.s32.totalorder %s27, 1
      %p164 = por %p162, %p163
      %p165 = scmp.ne.s32.totalorder %s156, %s157
      %p166 = scmp.eq.s32.totalorder %s27, 0
      %p167 = por %p165, %p166
      %p168 = scmp.ne.s32.totalorder %s156, %s157
      %p169 = scmp.eq.s32.totalorder %s28, 1
      %p170 = por %p168, %p169
      %p172 = scmp.ne.s32.totalorder %s157, %s171
      %p173 = scmp.eq.s32.totalorder %s28, 0
      %p174 = por %p172, %p173
      %s176 = sadd.s32 %s175, 1
      %p179 = scmp.eq.s32.totalorder %s22, 1
      %p180 = scmp.ne.s32.totalorder %s175, %s177
      %p181 = scmp.eq.s32.totalorder %s22, 0
      %p182 = por %p180, %p181
      %p183 = scmp.ne.s32.totalorder %s175, %s177
      %p184 = scmp.eq.s32.totalorder %s27, 1
      %p185 = por %p183, %p184
      %p186 = scmp.ne.s32.totalorder %s177, %s178
      %p187 = scmp.eq.s32.totalorder %s27, 0
      %p188 = por %p186, %p187
      %p189 = scmp.ne.s32.totalorder %s177, %s178
      %p190 = scmp.eq.s32.totalorder %s28, 1
      %p191 = por %p189, %p190
      %p193 = scmp.ne.s32.totalorder %s178, %s192
      %p194 = scmp.eq.s32.totalorder %s28, 0
      %p195 = por %p193, %p194
      %s196 = ssub.s32 %s29, %s41
      %s197 = ssub.s32 %s30, %s37
      %s198 = sor.u32 %s196, %s197
      %p199 = scmp.eq.s32.totalorder %s198, 0
      %s201 = sadd.s32 %s200, 1
      %s202 = scalar_select %p199, %s200, %s201
      %p205 = pneg %p199
      %p206 = scmp.eq.s32.totalorder %s22, 1
      %p207 = por %p205, %p206
      %p208 = scmp.ne.s32.totalorder %s200, %s203
      %p209 = scmp.eq.s32.totalorder %s22, 0
      %p210 = por %p208, %p209
      %p211 = scmp.ne.s32.totalorder %s200, %s203
      %p212 = scmp.eq.s32.totalorder %s27, 1
      %p213 = por %p211, %p212
      %p214 = scmp.ne.s32.totalorder %s203, %s204
      %p215 = scmp.eq.s32.totalorder %s27, 0
      %p216 = por %p214, %p215
      %p217 = scmp.ne.s32.totalorder %s203, %s204
      %p218 = scmp.eq.s32.totalorder %s28, 1
      %p219 = por %p217, %p218
      %p221 = scmp.ne.s32.totalorder %s204, %s220
      %p222 = scmp.eq.s32.totalorder %s28, 0
      %p223 = por %p221, %p222
      %s224 = ssub.s32 %s29, %s41
      %s225 = ssub.s32 %s30, %s37
      %s226 = sor.u32 %s224, %s225
      %p227 = scmp.eq.s32.totalorder %s226, 0
      %s229 = sadd.s32 %s228, 1
      %s230 = scalar_select %p227, %s228, %s229
      %p233 = pneg %p227
      %p234 = scmp.eq.s32.totalorder %s22, 1
      %p235 = por %p233, %p234
      %p236 = scmp.ne.s32.totalorder %s228, %s231
      %p237 = scmp.eq.s32.totalorder %s22, 0
      %p238 = por %p236, %p237
      %p239 = scmp.ne.s32.totalorder %s228, %s231
      %p240 = scmp.eq.s32.totalorder %s27, 1
      %p241 = por %p239, %p240
      %p242 = scmp.ne.s32.totalorder %s231, %s232
      %p243 = scmp.eq.s32.totalorder %s27, 0
      %p244 = por %p242, %p243
      %p245 = scmp.ne.s32.totalorder %s231, %s232
      %p246 = scmp.eq.s32.totalorder %s28, 1
      %p247 = por %p245, %p246
      %p249 = scmp.ne.s32.totalorder %s232, %s248
      %p250 = scmp.eq.s32.totalorder %s28, 0
      %p251 = por %p249, %p250
      %s252 = ssub.s32 %s29, %s41
      %s253 = ssub.s32 %s30, %s37
      %s254 = sor.u32 %s252, %s253
      %p255 = scmp.eq.s32.totalorder %s254, 0
      %s257 = sadd.s32 %s256, 1
      %s258 = scalar_select %p255, %s256, %s257
      %p261 = pneg %p255
      %p262 = scmp.eq.s32.totalorder %s22, 1
      %p263 = por %p261, %p262
      %p264 = scmp.ne.s32.totalorder %s256, %s259
      %p265 = scmp.eq.s32.totalorder %s22, 0
      %p266 = por %p264, %p265
      %p267 = scmp.ne.s32.totalorder %s256, %s259
      %p268 = scmp.eq.s32.totalorder %s27, 1
      %p269 = por %p267, %p268
      %p270 = scmp.ne.s32.totalorder %s259, %s260
      %p271 = scmp.eq.s32.totalorder %s27, 0
      %p272 = por %p270, %p271
      %p273 = scmp.ne.s32.totalorder %s259, %s260
      %p274 = scmp.eq.s32.totalorder %s28, 1
      %p275 = por %p273, %p274
      %p277 = scmp.ne.s32.totalorder %s260, %s276
      %p278 = scmp.eq.s32.totalorder %s28, 0
      %p279 = por %p277, %p278
      %p280 = scmp.le.s32.totalorder 1, %s22
      %p281 = scmp.lt.s32.totalorder %s22, 3
      %p282 = pnand %p280, %p281
      %p283 = pneg %p282
      // Predicated region
      $region9: #{tpu_custom_call.1} parent=5 // pred_check
        _
      $region10: #{tpu_custom_call.1} parent=5 // pred_check_branch
        %285 = sbr.rel (%p282) target = $region12
      $region11: #{tpu_custom_call.1} parent=5 // pred_region
        %s286 = ssub.s32 %s22, 1
        // Predicated region
        $region13: #{tpu_custom_call.1} parent=11 // pred_check
          %p287 = pneg %p83
        $region14: #{tpu_custom_call.1} parent=11 // pred_check_branch
          %289 = sbr.rel (%p287) target = $region16
        $region15: #{tpu_custom_call.1} parent=11 // pred_region
          _
        $region16: #{tpu_custom_call.1} parent=11 // pred_fallthru
          _
        // Predicated region
        $region17: #{tpu_custom_call.1} parent=11 // pred_check
          %p290 = pneg %p104
        $region18: #{tpu_custom_call.1} parent=11 // pred_check_branch
          %292 = sbr.rel (%p290) target = $region20
        $region19: #{tpu_custom_call.1} parent=11 // pred_region
          _
        $region20: #{tpu_custom_call.1} parent=11 // pred_fallthru
          _
        // Predicated region
        $region21: #{tpu_custom_call.1} parent=11 // pred_check
          %p293 = pneg %p125
        $region22: #{tpu_custom_call.1} parent=11 // pred_check_branch
          %295 = sbr.rel (%p293) target = $region24
        $region23: #{tpu_custom_call.1} parent=11 // pred_region
          _
        $region24: #{tpu_custom_call.1} parent=11 // pred_fallthru
          _
        // Predicated region
        $region25: #{tpu_custom_call.1} parent=11 // pred_check
          %p296 = pneg %p146
        $region26: #{tpu_custom_call.1} parent=11 // pred_check_branch
          %298 = sbr.rel (%p296) target = $region28
        $region27: #{tpu_custom_call.1} parent=11 // pred_region
          _
        $region28: #{tpu_custom_call.1} parent=11 // pred_fallthru
          _
        // Predicated region
        $region29: #{tpu_custom_call.1} parent=11 // pred_check
          %p299 = pneg %p167
        $region30: #{tpu_custom_call.1} parent=11 // pred_check_branch
          %301 = sbr.rel (%p299) target = $region32
        $region31: #{tpu_custom_call.1} parent=11 // pred_region
          _
        $region32: #{tpu_custom_call.1} parent=11 // pred_fallthru
          _
        // Predicated region
        $region33: #{tpu_custom_call.1} parent=11 // pred_check
          %p302 = pneg %p188
        $region34: #{tpu_custom_call.1} parent=11 // pred_check_branch
          %304 = sbr.rel (%p302) target = $region36
        $region35: #{tpu_custom_call.1} parent=11 // pred_region
          _
        $region36: #{tpu_custom_call.1} parent=11 // pred_fallthru
          _
      $region12: #{tpu_custom_call.1} parent=5 // pred_fallthru
        _
      %p305 = scmp.lt.s32.totalorder %s22, 2
      // Predicated region
      $region37: #{tpu_custom_call.1} parent=5 // pred_check
        %p306 = pneg %p305
      $region38: #{tpu_custom_call.1} parent=5 // pred_check_branch
        %308 = sbr.rel (%p306) target = $region40
      $region39: #{tpu_custom_call.1} parent=5 // pred_region
        // Predicated region
        $region41: #{tpu_custom_call.1} parent=39 // pred_check
          %p309 = pneg %p56
        $region42: #{tpu_custom_call.1} parent=39 // pred_check_branch
          %311 = sbr.rel (%p309) target = $region44
        $region43: #{tpu_custom_call.1} parent=39 // pred_region
          %p312 = scmp.lt.s32.totalorder %s29, 1
          %s313 = scalar_select %p312, %s29, 1
          %p314 = scmp.lt.s32.totalorder %s30, 0
          %s315 = scalar_select %p314, %s30, 0
          %s316 = sadd.s32 %s315, %s313
          %s317 = smul.addr %s316, 4
          %s318 = scalar_lea.vmem %s0, %s317
        $region44: #{tpu_custom_call.1} parent=39 // pred_fallthru
          _
      $region40: #{tpu_custom_call.1} parent=5 // pred_fallthru
        _
      %p319 = scmp.le.s32.totalorder 1, %s22
      %p320 = scmp.lt.s32.totalorder %s22, 3
      %p321 = pnand %p319, %p320
      %p322 = pneg %p321
      // Predicated region
      $region45: #{tpu_custom_call.1} parent=5 // pred_check
        _
      $region46: #{tpu_custom_call.1} parent=5 // pred_check_branch
        %324 = sbr.rel (%p321) target = $region48
      $region47: #{tpu_custom_call.1} parent=5 // pred_region
        %s325 = ssub.s32 %s22, 1
        %p326 = scmp.lt.s32.totalorder %s31, 1
        %s327 = scalar_select %p326, %s31, 1
        %p328 = scmp.lt.s32.totalorder %s32, 0
        %s329 = scalar_select %p328, %s32, 0
        %s330 = sadd.s32 %s329, %s327
        %s331 = smul.addr %s330, 4
        %s332 = scalar_lea.vmem %s0, %s331
        %p333 = pneg %p62
        %p334 = pneg %p59
        %p335 = pneg %p83
        %p336 = pneg %p80
        %p337 = pneg %p104
        %p338 = pneg %p101
        %p339 = pneg %p125
        %p340 = pneg %p122
        %p341 = pneg %p146
        %p342 = pneg %p143
        %p343 = pneg %p167
        %p344 = pneg %p164
        %p345 = pneg %p188
        %p346 = pneg %p185
        %p347 = pneg %p216
        %p348 = pneg %p213
        %s349 = sand.u32 %s203, 1
        %s350 = scalar_lea.sflag [#allocation3], %s349
        %s351 = sand.u32 %s203, 1
        %s352 = smul.addr %s351, 16
        %s353 = scalar_lea.vmem [#allocation2], %s352
        %p354 = pneg %p244
        %p355 = pneg %p241
        %s356 = sand.u32 %s27, 1
        %s357 = scalar_lea.sflag [#allocation5], %s356
        %s358 = sand.u32 %s231, 1
        %s359 = smul.addr %s358, 16
        %s360 = scalar_lea.vmem [#allocation4], %s359
        %p361 = pneg %p272
        %p362 = pneg %p269
        %s363 = sand.u32 %s27, 1
        %s364 = scalar_lea.sflag [#allocation5], %s363
        %s365 = sand.u32 %s259, 1
        %s366 = smul.addr %s365, 16
        %s367 = scalar_lea.vmem [#allocation6], %s366
        %p368 = scmp.lt.s32.totalorder %s31, 1
        %s369 = scalar_select %p368, %s31, 1
        %p370 = scmp.lt.s32.totalorder %s32, 0
        %s371 = scalar_select %p370, %s32, 0
        %s372 = sadd.s32 %s371, %s369
        %s373 = smul.addr %s372, 4
        %s374 = scalar_lea.vmem %s0, %s373
        %v376 = vld [vmem:[%s374] sm:$0xf]
        %v377 = vld [vmem:[%s1] sm:$0xf]
        %v378 = vld [vmem:[%s1 + $0x4] sm:$0xf]
        %v379 = vld [vmem:[%s1 + $0x8] sm:$0xf]
        %v380 = vld [vmem:[%s1 + $0xc] sm:$0xf]
        %v381 = vld [vmem:[%s2] sm:$0x1]
        %v383 = vlaneseq
        %v384 = vshrl.u32 %v383, 7
        %v385 = vsub.s32 0, %v384
        %v386 = vrot.slane %v381, %v385
        %v392 = vunpack.c.l.b16 %v377
        %v393 = vunpack.c.l.b16 %v378
        %v394 = vunpack.c.l.b16 %v379
        %v395 = vunpack.c.l.b16 %v380
        %v396 = vpack.c.b16 %v393, %v392
        %v397 = vpack.c.b16 %v395, %v394
        %vm400 = vcmask 261120
        %v402 = vsel %vm400, %v376, 0
        %404 = vmatprep.subr.bf16.mxu0 0
        %405 = vmatpush1.bf16.msra.mxu0 0
        %406 = vmatprep.subr.bf16.mxu0 0
        %407 = vmatpush1.bf16.msra.mxu0 0
        %408 = vmatprep.subr.bf16.mxu0 0
        %409 = vmatpush1.bf16.msra.mxu0 0
        %410 = vmatprep.subr.bf16.mxu0 0
        %411 = vmatpush1.bf16.msra.mxu0 0
        %412 = vmatprep.subr.bf16.mxu0 0
        %413 = vmatpush1.bf16.msra.mxu0 0
        %414 = vmatprep.subr.bf16.mxu0 0
        %415 = vmatpush1.bf16.msra.mxu0 0
        %416 = vmatprep.subr.bf16.mxu0 0
        %417 = vmatpush1.bf16.msra.mxu0 %v397
        %418 = vmatprep.subr.bf16.mxu0 0
        %419 = vmatpush1.bf16.msra.mxu0 %v396
        %420 = vmatprep.subr.bf16.mxu0 0
        %421 = vmatpush2.bf16.msra.mxu0 0
        %422 = vmatprep.subr.bf16.mxu0 0
        %423 = vmatpush2.bf16.msra.mxu0 0
        %424 = vmatprep.subr.bf16.mxu0 0
        %425 = vmatpush2.bf16.msra.mxu0 0
        %426 = vmatprep.subr.bf16.mxu0 0
        %427 = vmatpush2.bf16.msra.mxu0 0
        %428 = vmatprep.subr.bf16.mxu0 0
        %429 = vmatpush2.bf16.msra.mxu0 0
        %430 = vmatprep.subr.bf16.mxu0 0
        %431 = vmatpush2.bf16.msra.mxu0 0
        %432 = vmatprep.subr.bf16.mxu0 0
        %433 = vmatpush2.bf16.msra.mxu0 0
        %434 = vmatprep.subr.bf16.mxu0 0
        %435 = vmatpush2.bf16.msra.mxu0 0
        %436 = vmatprep.mubr.bf16.mxu0 0
        %437 = vmatmul.mubr.bf16.gmra.mxu0 %v402
        %v438 = vpop.f32.mrf.mxu0
        %v439 = vadd.f32 %v386, %v438
        %v440 = vpop.f32.mrf.mxu0
        %v441 = vpop.f32.mrf.mxu0
        %v442 = vpop.f32.mrf.mxu0
        %443 = vdwg.mxu0
        %v444 = vld [vmem:[%s3] sm:$0xf]
        %v445 = vld [vmem:[%s3 + $0x4] sm:$0xf]
        %v446 = vld [vmem:[%s3 + $0x8] sm:$0xf]
        %v447 = vld [vmem:[%s3 + $0xc] sm:$0xf]
        %v448 = vld [vmem:[%s4] sm:$0x1]
        %v450 = vlaneseq
        %v451 = vshrl.u32 %v450, 7
        %v452 = vsub.s32 0, %v451
        %v453 = vrot.slane %v448, %v452
        %v459 = vunpack.c.l.b16 %v444
        %v460 = vunpack.c.l.b16 %v445
        %v461 = vunpack.c.l.b16 %v446
        %v462 = vunpack.c.l.b16 %v447
        %v463 = vpack.c.b16 %v460, %v459
        %v464 = vpack.c.b16 %v462, %v461
        %467 = vmatprep.subr.bf16.mxu0 0
        %468 = vmatpush1.bf16.msra.mxu0 0
        %469 = vmatprep.subr.bf16.mxu0 0
        %470 = vmatpush1.bf16.msra.mxu0 0
        %471 = vmatprep.subr.bf16.mxu0 0
        %472 = vmatpush1.bf16.msra.mxu0 0
        %473 = vmatprep.subr.bf16.mxu0 0
        %474 = vmatpush1.bf16.msra.mxu0 0
        %475 = vmatprep.subr.bf16.mxu0 0
        %476 = vmatpush1.bf16.msra.mxu0 0
        %477 = vmatprep.subr.bf16.mxu0 0
        %478 = vmatpush1.bf16.msra.mxu0 0
        %479 = vmatprep.subr.bf16.mxu0 0
        %480 = vmatpush1.bf16.msra.mxu0 %v464
        %481 = vmatprep.subr.bf16.mxu0 0
        %482 = vmatpush1.bf16.msra.mxu0 %v463
        %483 = vmatprep.subr.bf16.mxu0 0
        %484 = vmatpush2.bf16.msra.mxu0 0
        %485 = vmatprep.subr.bf16.mxu0 0
        %486 = vmatpush2.bf16.msra.mxu0 0
        %487 = vmatprep.subr.bf16.mxu0 0
        %488 = vmatpush2.bf16.msra.mxu0 0
        %489 = vmatprep.subr.bf16.mxu0 0
        %490 = vmatpush2.bf16.msra.mxu0 0
        %491 = vmatprep.subr.bf16.mxu0 0
        %492 = vmatpush2.bf16.msra.mxu0 0
        %493 = vmatprep.subr.bf16.mxu0 0
        %494 = vmatpush2.bf16.msra.mxu0 0
        %495 = vmatprep.subr.bf16.mxu0 0
        %496 = vmatpush2.bf16.msra.mxu0 0
        %497 = vmatprep.subr.bf16.mxu0 0
        %498 = vmatpush2.bf16.msra.mxu0 0
        %499 = vmatprep.mubr.bf16.mxu0 0
        %500 = vmatmul.mubr.bf16.gmra.mxu0 %v402
        %v501 = vpop.f32.mrf.mxu0
        %v502 = vadd.f32 %v453, %v501
        %v503 = vpop.f32.mrf.mxu0
        %v504 = vpop.f32.mrf.mxu0
        %v505 = vpop.f32.mrf.mxu0
        %506 = vdwg.mxu0
        %v507 = vld [vmem:[%s5] sm:$0xf]
        %v508 = vld [vmem:[%s5 + $0x4] sm:$0xf]
        %v509 = vld [vmem:[%s5 + $0x8] sm:$0xf]
        %v510 = vld [vmem:[%s5 + $0xc] sm:$0xf]
        %v511 = vld [vmem:[%s6] sm:$0x1]
        %v513 = vlaneseq
        %v514 = vshrl.u32 %v513, 7
        %v515 = vsub.s32 0, %v514
        %v516 = vrot.slane %v511, %v515
        %v522 = vunpack.c.l.b16 %v507
        %v523 = vunpack.c.l.b16 %v508
        %v524 = vunpack.c.l.b16 %v509
        %v525 = vunpack.c.l.b16 %v510
        %v526 = vpack.c.b16 %v523, %v522
        %v527 = vpack.c.b16 %v525, %v524
        %530 = vmatprep.subr.bf16.mxu0 0
        %531 = vmatpush1.bf16.msra.mxu0 0
        %532 = vmatprep.subr.bf16.mxu0 0
        %533 = vmatpush1.bf16.msra.mxu0 0
        %534 = vmatprep.subr.bf16.mxu0 0
        %535 = vmatpush1.bf16.msra.mxu0 0
        %536 = vmatprep.subr.bf16.mxu0 0
        %537 = vmatpush1.bf16.msra.mxu0 0
        %538 = vmatprep.subr.bf16.mxu0 0
        %539 = vmatpush1.bf16.msra.mxu0 0
        %540 = vmatprep.subr.bf16.mxu0 0
        %541 = vmatpush1.bf16.msra.mxu0 0
        %542 = vmatprep.subr.bf16.mxu0 0
        %543 = vmatpush1.bf16.msra.mxu0 %v527
        %544 = vmatprep.subr.bf16.mxu0 0
        %545 = vmatpush1.bf16.msra.mxu0 %v526
        %546 = vmatprep.subr.bf16.mxu0 0
        %547 = vmatpush2.bf16.msra.mxu0 0
        %548 = vmatprep.subr.bf16.mxu0 0
        %549 = vmatpush2.bf16.msra.mxu0 0
        %550 = vmatprep.subr.bf16.mxu0 0
        %551 = vmatpush2.bf16.msra.mxu0 0
        %552 = vmatprep.subr.bf16.mxu0 0
        %553 = vmatpush2.bf16.msra.mxu0 0
        %554 = vmatprep.subr.bf16.mxu0 0
        %555 = vmatpush2.bf16.msra.mxu0 0
        %556 = vmatprep.subr.bf16.mxu0 0
        %557 = vmatpush2.bf16.msra.mxu0 0
        %558 = vmatprep.subr.bf16.mxu0 0
        %559 = vmatpush2.bf16.msra.mxu0 0
        %560 = vmatprep.subr.bf16.mxu0 0
        %561 = vmatpush2.bf16.msra.mxu0 0
        %562 = vmatprep.mubr.bf16.mxu0 0
        %563 = vmatmul.mubr.bf16.gmra.mxu0 %v402
        %v564 = vpop.f32.mrf.mxu0
        %v565 = vadd.f32 %v516, %v564
        %v566 = vpop.f32.mrf.mxu0
        %v567 = vpop.f32.mrf.mxu0
        %v568 = vpop.f32.mrf.mxu0
        %569 = vdwg.mxu0
        %v570 = vmul.f32 %v439, 0.35355338
        %v571 = vpack.c.bf16 %v570, %v570
        %vm572 = vcmask 60416
        %573 = vst.msk [vmem:[%s353] sm:$0xf] %vm572, %v571
        %v574 = vpack.c.bf16 %v502, %v502
        %575 = vst.msk [vmem:[%s360] sm:$0xf] %vm572, %v574
        %v576 = vpack.c.bf16 %v565, %v565
        %577 = vst.msk [vmem:[%s367] sm:$0xf] %vm572, %v576
        %s578 = scalar_lea.vmem %s1, 16
        %v579 = vld [vmem:[%s578] sm:$0xf]
        %v580 = vld [vmem:[%s578 + $0x4] sm:$0xf]
        %v581 = vld [vmem:[%s578 + $0x8] sm:$0xf]
        %v582 = vld [vmem:[%s578 + $0xc] sm:$0xf]
        %s583 = scalar_lea.vmem %s2, 1
        %v584 = vld [vmem:[%s583] sm:$0x1]
        %v586 = vlaneseq
        %v587 = vshrl.u32 %v586, 7
        %v588 = vsub.s32 0, %v587
        %v589 = vrot.slane %v584, %v588
        %v595 = vunpack.c.l.b16 %v579
        %v596 = vunpack.c.l.b16 %v580
        %v597 = vunpack.c.l.b16 %v581
        %v598 = vunpack.c.l.b16 %v582
        %v599 = vpack.c.b16 %v596, %v595
        %v600 = vpack.c.b16 %v598, %v597
        %603 = vmatprep.subr.bf16.mxu0 0
        %604 = vmatpush1.bf16.msra.mxu0 0
        %605 = vmatprep.subr.bf16.mxu0 0
        %606 = vmatpush1.bf16.msra.mxu0 0
        %607 = vmatprep.subr.bf16.mxu0 0
        %608 = vmatpush1.bf16.msra.mxu0 0
        %609 = vmatprep.subr.bf16.mxu0 0
        %610 = vmatpush1.bf16.msra.mxu0 0
        %611 = vmatprep.subr.bf16.mxu0 0
        %612 = vmatpush1.bf16.msra.mxu0 0
        %613 = vmatprep.subr.bf16.mxu0 0
        %614 = vmatpush1.bf16.msra.mxu0 0
        %615 = vmatprep.subr.bf16.mxu0 0
        %616 = vmatpush1.bf16.msra.mxu0 %v600
        %617 = vmatprep.subr.bf16.mxu0 0
        %618 = vmatpush1.bf16.msra.mxu0 %v599
        %619 = vmatprep.subr.bf16.mxu0 0
        %620 = vmatpush2.bf16.msra.mxu0 0
        %621 = vmatprep.subr.bf16.mxu0 0
        %622 = vmatpush2.bf16.msra.mxu0 0
        %623 = vmatprep.subr.bf16.mxu0 0
        %624 = vmatpush2.bf16.msra.mxu0 0
        %625 = vmatprep.subr.bf16.mxu0 0
        %626 = vmatpush2.bf16.msra.mxu0 0
        %627 = vmatprep.subr.bf16.mxu0 0
        %628 = vmatpush2.bf16.msra.mxu0 0
        %629 = vmatprep.subr.bf16.mxu0 0
        %630 = vmatpush2.bf16.msra.mxu0 0
        %631 = vmatprep.subr.bf16.mxu0 0
        %632 = vmatpush2.bf16.msra.mxu0 0
        %633 = vmatprep.subr.bf16.mxu0 0
        %634 = vmatpush2.bf16.msra.mxu0 0
        %635 = vmatprep.mubr.bf16.mxu0 0
        %636 = vmatmul.mubr.bf16.gmra.mxu0 %v402
        %v637 = vpop.f32.mrf.mxu0
        %v638 = vadd.f32 %v589, %v637
        %v639 = vpop.f32.mrf.mxu0
        %v640 = vpop.f32.mrf.mxu0
        %v641 = vpop.f32.mrf.mxu0
        %642 = vdwg.mxu0
        %s643 = scalar_lea.vmem %s3, 16
        %v644 = vld [vmem:[%s643] sm:$0xf]
        %v645 = vld [vmem:[%s643 + $0x4] sm:$0xf]
        %v646 = vld [vmem:[%s643 + $0x8] sm:$0xf]
        %v647 = vld [vmem:[%s643 + $0xc] sm:$0xf]
        %s648 = scalar_lea.vmem %s4, 1
        %v649 = vld [vmem:[%s648] sm:$0x1]
        %v651 = vlaneseq
        %v652 = vshrl.u32 %v651, 7
        %v653 = vsub.s32 0, %v652
        %v654 = vrot.slane %v649, %v653
        %v660 = vunpack.c.l.b16 %v644
        %v661 = vunpack.c.l.b16 %v645
        %v662 = vunpack.c.l.b16 %v646
        %v663 = vunpack.c.l.b16 %v647
        %v664 = vpack.c.b16 %v661, %v660
        %v665 = vpack.c.b16 %v663, %v662
        %668 = vmatprep.subr.bf16.mxu0 0
        %669 = vmatpush1.bf16.msra.mxu0 0
        %670 = vmatprep.subr.bf16.mxu0 0
        %671 = vmatpush1.bf16.msra.mxu0 0
        %672 = vmatprep.subr.bf16.mxu0 0
        %673 = vmatpush1.bf16.msra.mxu0 0
        %674 = vmatprep.subr.bf16.mxu0 0
        %675 = vmatpush1.bf16.msra.mxu0 0
        %676 = vmatprep.subr.bf16.mxu0 0
        %677 = vmatpush1.bf16.msra.mxu0 0
        %678 = vmatprep.subr.bf16.mxu0 0
        %679 = vmatpush1.bf16.msra.mxu0 0
        %680 = vmatprep.subr.bf16.mxu0 0
        %681 = vmatpush1.bf16.msra.mxu0 %v665
        %682 = vmatprep.subr.bf16.mxu0 0
        %683 = vmatpush1.bf16.msra.mxu0 %v664
        %684 = vmatprep.subr.bf16.mxu0 0
        %685 = vmatpush2.bf16.msra.mxu0 0
        %686 = vmatprep.subr.bf16.mxu0 0
        %687 = vmatpush2.bf16.msra.mxu0 0
        %688 = vmatprep.subr.bf16.mxu0 0
        %689 = vmatpush2.bf16.msra.mxu0 0
        %690 = vmatprep.subr.bf16.mxu0 0
        %691 = vmatpush2.bf16.msra.mxu0 0
        %692 = vmatprep.subr.bf16.mxu0 0
        %693 = vmatpush2.bf16.msra.mxu0 0
        %694 = vmatprep.subr.bf16.mxu0 0
        %695 = vmatpush2.bf16.msra.mxu0 0
        %696 = vmatprep.subr.bf16.mxu0 0
        %697 = vmatpush2.bf16.msra.mxu0 0
        %698 = vmatprep.subr.bf16.mxu0 0
        %699 = vmatpush2.bf16.msra.mxu0 0
        %700 = vmatprep.mubr.bf16.mxu0 0
        %701 = vmatmul.mubr.bf16.gmra.mxu0 %v402
        %v702 = vpop.f32.mrf.mxu0
        %v703 = vadd.f32 %v654, %v702
        %v704 = vpop.f32.mrf.mxu0
        %v705 = vpop.f32.mrf.mxu0
        %v706 = vpop.f32.mrf.mxu0
        %707 = vdwg.mxu0
        %s708 = scalar_lea.vmem %s5, 16
        %v709 = vld [vmem:[%s708] sm:$0xf]
        %v710 = vld [vmem:[%s708 + $0x4] sm:$0xf]
        %v711 = vld [vmem:[%s708 + $0x8] sm:$0xf]
        %v712 = vld [vmem:[%s708 + $0xc] sm:$0xf]
        %s713 = scalar_lea.vmem %s6, 1
        %v714 = vld [vmem:[%s713] sm:$0x1]
        %v716 = vlaneseq
        %v717 = vshrl.u32 %v716, 7
        %v718 = vsub.s32 0, %v717
        %v719 = vrot.slane %v714, %v718
        %v725 = vunpack.c.l.b16 %v709
        %v726 = vunpack.c.l.b16 %v710
        %v727 = vunpack.c.l.b16 %v711
        %v728 = vunpack.c.l.b16 %v712
        %v729 = vpack.c.b16 %v726, %v725
        %v730 = vpack.c.b16 %v728, %v727
        %733 = vmatprep.subr.bf16.mxu0 0
        %734 = vmatpush1.bf16.msra.mxu0 0
        %735 = vmatprep.subr.bf16.mxu0 0
        %736 = vmatpush1.bf16.msra.mxu0 0
        %737 = vmatprep.subr.bf16.mxu0 0
        %738 = vmatpush1.bf16.msra.mxu0 0
        %739 = vmatprep.subr.bf16.mxu0 0
        %740 = vmatpush1.bf16.msra.mxu0 0
        %741 = vmatprep.subr.bf16.mxu0 0
        %742 = vmatpush1.bf16.msra.mxu0 0
        %743 = vmatprep.subr.bf16.mxu0 0
        %744 = vmatpush1.bf16.msra.mxu0 0
        %745 = vmatprep.subr.bf16.mxu0 0
        %746 = vmatpush1.bf16.msra.mxu0 %v730
        %747 = vmatprep.subr.bf16.mxu0 0
        %748 = vmatpush1.bf16.msra.mxu0 %v729
        %749 = vmatprep.subr.bf16.mxu0 0
        %750 = vmatpush2.bf16.msra.mxu0 0
        %751 = vmatprep.subr.bf16.mxu0 0
        %752 = vmatpush2.bf16.msra.mxu0 0
        %753 = vmatprep.subr.bf16.mxu0 0
        %754 = vmatpush2.bf16.msra.mxu0 0
        %755 = vmatprep.subr.bf16.mxu0 0
        %756 = vmatpush2.bf16.msra.mxu0 0
        %757 = vmatprep.subr.bf16.mxu0 0
        %758 = vmatpush2.bf16.msra.mxu0 0
        %759 = vmatprep.subr.bf16.mxu0 0
        %760 = vmatpush2.bf16.msra.mxu0 0
        %761 = vmatprep.subr.bf16.mxu0 0
        %762 = vmatpush2.bf16.msra.mxu0 0
        %763 = vmatprep.subr.bf16.mxu0 0
        %764 = vmatpush2.bf16.msra.mxu0 0
        %765 = vmatprep.mubr.bf16.mxu0 0
        %766 = vmatmul.mubr.bf16.gmra.mxu0 %v402
        %v767 = vpop.f32.mrf.mxu0
        %v768 = vadd.f32 %v719, %v767
        %v769 = vpop.f32.mrf.mxu0
        %v770 = vpop.f32.mrf.mxu0
        %v771 = vpop.f32.mrf.mxu0
        %772 = vdwg.mxu0
        %v773 = vmul.f32 %v638, 0.35355338
        %v774 = vpack.c.bf16 %v773, %v773
        %s775 = scalar_lea.vmem %s353, 4 [#allocation2]
        %776 = vst.msk [vmem:[%s775] sm:$0xf] %vm572, %v774
        %v777 = vpack.c.bf16 %v703, %v703
        %s778 = scalar_lea.vmem %s360, 4 [#allocation4]
        %779 = vst.msk [vmem:[%s778] sm:$0xf] %vm572, %v777
        %v780 = vpack.c.bf16 %v768, %v768
        %s781 = scalar_lea.vmem %s367, 4 [#allocation6]
        %782 = vst.msk [vmem:[%s781] sm:$0xf] %vm572, %v780
        %s783 = scalar_lea.vmem %s1, 32
        %v784 = vld [vmem:[%s783] sm:$0xf]
        %v785 = vld [vmem:[%s783 + $0x4] sm:$0xf]
        %v786 = vld [vmem:[%s783 + $0x8] sm:$0xf]
        %v787 = vld [vmem:[%s783 + $0xc] sm:$0xf]
        %s788 = scalar_lea.vmem %s2, 2
        %v789 = vld [vmem:[%s788] sm:$0x1]
        %v791 = vlaneseq
        %v792 = vshrl.u32 %v791, 7
        %v793 = vsub.s32 0, %v792
        %v794 = vrot.slane %v789, %v793
        %v800 = vunpack.c.l.b16 %v784
        %v801 = vunpack.c.l.b16 %v785
        %v802 = vunpack.c.l.b16 %v786
        %v803 = vunpack.c.l.b16 %v787
        %v804 = vpack.c.b16 %v801, %v800
        %v805 = vpack.c.b16 %v803, %v802
        %808 = vmatprep.subr.bf16.mxu0 0
        %809 = vmatpush1.bf16.msra.mxu0 0
        %810 = vmatprep.subr.bf16.mxu0 0
        %811 = vmatpush1.bf16.msra.mxu0 0
        %812 = vmatprep.subr.bf16.mxu0 0
        %813 = vmatpush1.bf16.msra.mxu0 0
        %814 = vmatprep.subr.bf16.mxu0 0
        %815 = vmatpush1.bf16.msra.mxu0 0
        %816 = vmatprep.subr.bf16.mxu0 0
        %817 = vmatpush1.bf16.msra.mxu0 0
        %818 = vmatprep.subr.bf16.mxu0 0
        %819 = vmatpush1.bf16.msra.mxu0 0
        %820 = vmatprep.subr.bf16.mxu0 0
        %821 = vmatpush1.bf16.msra.mxu0 %v805
        %822 = vmatprep.subr.bf16.mxu0 0
        %823 = vmatpush1.bf16.msra.mxu0 %v804
        %824 = vmatprep.subr.bf16.mxu0 0
        %825 = vmatpush2.bf16.msra.mxu0 0
        %826 = vmatprep.subr.bf16.mxu0 0
        %827 = vmatpush2.bf16.msra.mxu0 0
        %828 = vmatprep.subr.bf16.mxu0 0
        %829 = vmatpush2.bf16.msra.mxu0 0
        %830 = vmatprep.subr.bf16.mxu0 0
        %831 = vmatpush2.bf16.msra.mxu0 0
        %832 = vmatprep.subr.bf16.mxu0 0
        %833 = vmatpush2.bf16.msra.mxu0 0
        %834 = vmatprep.subr.bf16.mxu0 0
        %835 = vmatpush2.bf16.msra.mxu0 0
        %836 = vmatprep.subr.bf16.mxu0 0
        %837 = vmatpush2.bf16.msra.mxu0 0
        %838 = vmatprep.subr.bf16.mxu0 0
        %839 = vmatpush2.bf16.msra.mxu0 0
        %840 = vmatprep.mubr.bf16.mxu0 0
        %841 = vmatmul.mubr.bf16.gmra.mxu0 %v402
        %v842 = vpop.f32.mrf.mxu0
        %v843 = vadd.f32 %v794, %v842
        %v844 = vpop.f32.mrf.mxu0
        %v845 = vpop.f32.mrf.mxu0
        %v846 = vpop.f32.mrf.mxu0
        %847 = vdwg.mxu0
        %s848 = scalar_lea.vmem %s3, 32
        %v849 = vld [vmem:[%s848] sm:$0xf]
        %v850 = vld [vmem:[%s848 + $0x4] sm:$0xf]
        %v851 = vld [vmem:[%s848 + $0x8] sm:$0xf]
        %v852 = vld [vmem:[%s848 + $0xc] sm:$0xf]
        %s853 = scalar_lea.vmem %s4, 2
        %v854 = vld [vmem:[%s853] sm:$0x1]
        %v856 = vlaneseq
        %v857 = vshrl.u32 %v856, 7
        %v858 = vsub.s32 0, %v857
        %v859 = vrot.slane %v854, %v858
        %v865 = vunpack.c.l.b16 %v849
        %v866 = vunpack.c.l.b16 %v850
        %v867 = vunpack.c.l.b16 %v851
        %v868 = vunpack.c.l.b16 %v852
        %v869 = vpack.c.b16 %v866, %v865
        %v870 = vpack.c.b16 %v868, %v867
        %873 = vmatprep.subr.bf16.mxu0 0
        %874 = vmatpush1.bf16.msra.mxu0 0
        %875 = vmatprep.subr.bf16.mxu0 0
        %876 = vmatpush1.bf16.msra.mxu0 0
        %877 = vmatprep.subr.bf16.mxu0 0
        %878 = vmatpush1.bf16.msra.mxu0 0
        %879 = vmatprep.subr.bf16.mxu0 0
        %880 = vmatpush1.bf16.msra.mxu0 0
        %881 = vmatprep.subr.bf16.mxu0 0
        %882 = vmatpush1.bf16.msra.mxu0 0
        %883 = vmatprep.subr.bf16.mxu0 0
        %884 = vmatpush1.bf16.msra.mxu0 0
        %885 = vmatprep.subr.bf16.mxu0 0
        %886 = vmatpush1.bf16.msra.mxu0 %v870
        %887 = vmatprep.subr.bf16.mxu0 0
        %888 = vmatpush1.bf16.msra.mxu0 %v869
        %889 = vmatprep.subr.bf16.mxu0 0
        %890 = vmatpush2.bf16.msra.mxu0 0
        %891 = vmatprep.subr.bf16.mxu0 0
        %892 = vmatpush2.bf16.msra.mxu0 0
        %893 = vmatprep.subr.bf16.mxu0 0
        %894 = vmatpush2.bf16.msra.mxu0 0
        %895 = vmatprep.subr.bf16.mxu0 0
        %896 = vmatpush2.bf16.msra.mxu0 0
        %897 = vmatprep.subr.bf16.mxu0 0
        %898 = vmatpush2.bf16.msra.mxu0 0
        %899 = vmatprep.subr.bf16.mxu0 0
        %900 = vmatpush2.bf16.msra.mxu0 0
        %901 = vmatprep.subr.bf16.mxu0 0
        %902 = vmatpush2.bf16.msra.mxu0 0
        %903 = vmatprep.subr.bf16.mxu0 0
        %904 = vmatpush2.bf16.msra.mxu0 0
        %905 = vmatprep.mubr.bf16.mxu0 0
        %906 = vmatmul.mubr.bf16.gmra.mxu0 %v402
        %v907 = vpop.f32.mrf.mxu0
        %v908 = vadd.f32 %v859, %v907
        %v909 = vpop.f32.mrf.mxu0
        %v910 = vpop.f32.mrf.mxu0
        %v911 = vpop.f32.mrf.mxu0
        %912 = vdwg.mxu0
        %s913 = scalar_lea.vmem %s5, 32
        %v914 = vld [vmem:[%s913] sm:$0xf]
        %v915 = vld [vmem:[%s913 + $0x4] sm:$0xf]
        %v916 = vld [vmem:[%s913 + $0x8] sm:$0xf]
        %v917 = vld [vmem:[%s913 + $0xc] sm:$0xf]
        %s918 = scalar_lea.vmem %s6, 2
        %v919 = vld [vmem:[%s918] sm:$0x1]
        %v921 = vlaneseq
        %v922 = vshrl.u32 %v921, 7
        %v923 = vsub.s32 0, %v922
        %v924 = vrot.slane %v919, %v923
        %v930 = vunpack.c.l.b16 %v914
        %v931 = vunpack.c.l.b16 %v915
        %v932 = vunpack.c.l.b16 %v916
        %v933 = vunpack.c.l.b16 %v917
        %v934 = vpack.c.b16 %v931, %v930
        %v935 = vpack.c.b16 %v933, %v932
        %938 = vmatprep.subr.bf16.mxu0 0
        %939 = vmatpush1.bf16.msra.mxu0 0
        %940 = vmatprep.subr.bf16.mxu0 0
        %941 = vmatpush1.bf16.msra.mxu0 0
        %942 = vmatprep.subr.bf16.mxu0 0
        %943 = vmatpush1.bf16.msra.mxu0 0
        %944 = vmatprep.subr.bf16.mxu0 0
        %945 = vmatpush1.bf16.msra.mxu0 0
        %946 = vmatprep.subr.bf16.mxu0 0
        %947 = vmatpush1.bf16.msra.mxu0 0
        %948 = vmatprep.subr.bf16.mxu0 0
        %949 = vmatpush1.bf16.msra.mxu0 0
        %950 = vmatprep.subr.bf16.mxu0 0
        %951 = vmatpush1.bf16.msra.mxu0 %v935
        %952 = vmatprep.subr.bf16.mxu0 0
        %953 = vmatpush1.bf16.msra.mxu0 %v934
        %954 = vmatprep.subr.bf16.mxu0 0
        %955 = vmatpush2.bf16.msra.mxu0 0
        %956 = vmatprep.subr.bf16.mxu0 0
        %957 = vmatpush2.bf16.msra.mxu0 0
        %958 = vmatprep.subr.bf16.mxu0 0
        %959 = vmatpush2.bf16.msra.mxu0 0
        %960 = vmatprep.subr.bf16.mxu0 0
        %961 = vmatpush2.bf16.msra.mxu0 0
        %962 = vmatprep.subr.bf16.mxu0 0
        %963 = vmatpush2.bf16.msra.mxu0 0
        %964 = vmatprep.subr.bf16.mxu0 0
        %965 = vmatpush2.bf16.msra.mxu0 0
        %966 = vmatprep.subr.bf16.mxu0 0
        %967 = vmatpush2.bf16.msra.mxu0 0
        %968 = vmatprep.subr.bf16.mxu0 0
        %969 = vmatpush2.bf16.msra.mxu0 0
        %970 = vmatprep.mubr.bf16.mxu0 0
        %971 = vmatmul.mubr.bf16.gmra.mxu0 %v402
        %v972 = vpop.f32.mrf.mxu0
        %v973 = vadd.f32 %v924, %v972
        %v974 = vpop.f32.mrf.mxu0
        %v975 = vpop.f32.mrf.mxu0
        %v976 = vpop.f32.mrf.mxu0
        %977 = vdwg.mxu0
        %v978 = vmul.f32 %v843, 0.35355338
        %v979 = vpack.c.bf16 %v978, %v978
        %s980 = scalar_lea.vmem %s353, 8 [#allocation2]
        %981 = vst.msk [vmem:[%s980] sm:$0xf] %vm572, %v979
        %v982 = vpack.c.bf16 %v908, %v908
        %s983 = scalar_lea.vmem %s360, 8 [#allocation4]
        %984 = vst.msk [vmem:[%s983] sm:$0xf] %vm572, %v982
        %v985 = vpack.c.bf16 %v973, %v973
        %s986 = scalar_lea.vmem %s367, 8 [#allocation6]
        %987 = vst.msk [vmem:[%s986] sm:$0xf] %vm572, %v985
        %s988 = scalar_lea.vmem %s1, 48
        %v989 = vld [vmem:[%s988] sm:$0xf]
        %v990 = vld [vmem:[%s988 + $0x4] sm:$0xf]
        %v991 = vld [vmem:[%s988 + $0x8] sm:$0xf]
        %v992 = vld [vmem:[%s988 + $0xc] sm:$0xf]
        %s993 = scalar_lea.vmem %s2, 3
        %v994 = vld [vmem:[%s993] sm:$0x1]
        %v996 = vlaneseq
        %v997 = vshrl.u32 %v996, 7
        %v998 = vsub.s32 0, %v997
        %v999 = vrot.slane %v994, %v998
        %v1005 = vunpack.c.l.b16 %v989
        %v1006 = vunpack.c.l.b16 %v990
        %v1007 = vunpack.c.l.b16 %v991
        %v1008 = vunpack.c.l.b16 %v992
        %v1009 = vpack.c.b16 %v1006, %v1005
        %v1010 = vpack.c.b16 %v1008, %v1007
        %1013 = vmatprep.subr.bf16.mxu0 0
        %1014 = vmatpush1.bf16.msra.mxu0 0
        %1015 = vmatprep.subr.bf16.mxu0 0
        %1016 = vmatpush1.bf16.msra.mxu0 0
        %1017 = vmatprep.subr.bf16.mxu0 0
        %1018 = vmatpush1.bf16.msra.mxu0 0
        %1019 = vmatprep.subr.bf16.mxu0 0
        %1020 = vmatpush1.bf16.msra.mxu0 0
        %1021 = vmatprep.subr.bf16.mxu0 0
        %1022 = vmatpush1.bf16.msra.mxu0 0
        %1023 = vmatprep.subr.bf16.mxu0 0
        %1024 = vmatpush1.bf16.msra.mxu0 0
        %1025 = vmatprep.subr.bf16.mxu0 0
        %1026 = vmatpush1.bf16.msra.mxu0 %v1010
        %1027 = vmatprep.subr.bf16.mxu0 0
        %1028 = vmatpush1.bf16.msra.mxu0 %v1009
        %1029 = vmatprep.subr.bf16.mxu0 0
        %1030 = vmatpush2.bf16.msra.mxu0 0
        %1031 = vmatprep.subr.bf16.mxu0 0
        %1032 = vmatpush2.bf16.msra.mxu0 0
        %1033 = vmatprep.subr.bf16.mxu0 0
        %1034 = vmatpush2.bf16.msra.mxu0 0
        %1035 = vmatprep.subr.bf16.mxu0 0
        %1036 = vmatpush2.bf16.msra.mxu0 0
        %1037 = vmatprep.subr.bf16.mxu0 0
        %1038 = vmatpush2.bf16.msra.mxu0 0
        %1039 = vmatprep.subr.bf16.mxu0 0
        %1040 = vmatpush2.bf16.msra.mxu0 0
        %1041 = vmatprep.subr.bf16.mxu0 0
        %1042 = vmatpush2.bf16.msra.mxu0 0
        %1043 = vmatprep.subr.bf16.mxu0 0
        %1044 = vmatpush2.bf16.msra.mxu0 0
        %1045 = vmatprep.mubr.bf16.mxu0 0
        %1046 = vmatmul.mubr.bf16.gmra.mxu0 %v402
        %v1047 = vpop.f32.mrf.mxu0
        %v1048 = vadd.f32 %v999, %v1047
        %v1049 = vpop.f32.mrf.mxu0
        %v1050 = vpop.f32.mrf.mxu0
        %v1051 = vpop.f32.mrf.mxu0
        %1052 = vdwg.mxu0
        %s1053 = scalar_lea.vmem %s3, 48
        %v1054 = vld [vmem:[%s1053] sm:$0xf]
        %v1055 = vld [vmem:[%s1053 + $0x4] sm:$0xf]
        %v1056 = vld [vmem:[%s1053 + $0x8] sm:$0xf]
        %v1057 = vld [vmem:[%s1053 + $0xc] sm:$0xf]
        %s1058 = scalar_lea.vmem %s4, 3
        %v1059 = vld [vmem:[%s1058] sm:$0x1]
        %v1061 = vlaneseq
        %v1062 = vshrl.u32 %v1061, 7
        %v1063 = vsub.s32 0, %v1062
        %v1064 = vrot.slane %v1059, %v1063
        %v1070 = vunpack.c.l.b16 %v1054
        %v1071 = vunpack.c.l.b16 %v1055
        %v1072 = vunpack.c.l.b16 %v1056
        %v1073 = vunpack.c.l.b16 %v1057
        %v1074 = vpack.c.b16 %v1071, %v1070
        %v1075 = vpack.c.b16 %v1073, %v1072
        %1078 = vmatprep.subr.bf16.mxu0 0
        %1079 = vmatpush1.bf16.msra.mxu0 0
        %1080 = vmatprep.subr.bf16.mxu0 0
        %1081 = vmatpush1.bf16.msra.mxu0 0
        %1082 = vmatprep.subr.bf16.mxu0 0
        %1083 = vmatpush1.bf16.msra.mxu0 0
        %1084 = vmatprep.subr.bf16.mxu0 0
        %1085 = vmatpush1.bf16.msra.mxu0 0
        %1086 = vmatprep.subr.bf16.mxu0 0
        %1087 = vmatpush1.bf16.msra.mxu0 0
        %1088 = vmatprep.subr.bf16.mxu0 0
        %1089 = vmatpush1.bf16.msra.mxu0 0
        %1090 = vmatprep.subr.bf16.mxu0 0
        %1091 = vmatpush1.bf16.msra.mxu0 %v1075
        %1092 = vmatprep.subr.bf16.mxu0 0
        %1093 = vmatpush1.bf16.msra.mxu0 %v1074
        %1094 = vmatprep.subr.bf16.mxu0 0
        %1095 = vmatpush2.bf16.msra.mxu0 0
        %1096 = vmatprep.subr.bf16.mxu0 0
        %1097 = vmatpush2.bf16.msra.mxu0 0
        %1098 = vmatprep.subr.bf16.mxu0 0
        %1099 = vmatpush2.bf16.msra.mxu0 0
        %1100 = vmatprep.subr.bf16.mxu0 0
        %1101 = vmatpush2.bf16.msra.mxu0 0
        %1102 = vmatprep.subr.bf16.mxu0 0
        %1103 = vmatpush2.bf16.msra.mxu0 0
        %1104 = vmatprep.subr.bf16.mxu0 0
        %1105 = vmatpush2.bf16.msra.mxu0 0
        %1106 = vmatprep.subr.bf16.mxu0 0
        %1107 = vmatpush2.bf16.msra.mxu0 0
        %1108 = vmatprep.subr.bf16.mxu0 0
        %1109 = vmatpush2.bf16.msra.mxu0 0
        %1110 = vmatprep.mubr.bf16.mxu0 0
        %1111 = vmatmul.mubr.bf16.gmra.mxu0 %v402
        %v1112 = vpop.f32.mrf.mxu0
        %v1113 = vadd.f32 %v1064, %v1112
        %v1114 = vpop.f32.mrf.mxu0
        %v1115 = vpop.f32.mrf.mxu0
        %v1116 = vpop.f32.mrf.mxu0
        %1117 = vdwg.mxu0
        %s1118 = scalar_lea.vmem %s5, 48
        %v1119 = vld [vmem:[%s1118] sm:$0xf]
        %v1120 = vld [vmem:[%s1118 + $0x4] sm:$0xf]
        %v1121 = vld [vmem:[%s1118 + $0x8] sm:$0xf]
        %v1122 = vld [vmem:[%s1118 + $0xc] sm:$0xf]
        %s1123 = scalar_lea.vmem %s6, 3
        %v1124 = vld [vmem:[%s1123] sm:$0x1]
        %v1126 = vlaneseq
        %v1127 = vshrl.u32 %v1126, 7
        %v1128 = vsub.s32 0, %v1127
        %v1129 = vrot.slane %v1124, %v1128
        %v1135 = vunpack.c.l.b16 %v1119
        %v1136 = vunpack.c.l.b16 %v1120
        %v1137 = vunpack.c.l.b16 %v1121
        %v1138 = vunpack.c.l.b16 %v1122
        %v1139 = vpack.c.b16 %v1136, %v1135
        %v1140 = vpack.c.b16 %v1138, %v1137
        %1143 = vmatprep.subr.bf16.mxu0 0
        %1144 = vmatpush1.bf16.msra.mxu0 0
        %1145 = vmatprep.subr.bf16.mxu0 0
        %1146 = vmatpush1.bf16.msra.mxu0 0
        %1147 = vmatprep.subr.bf16.mxu0 0
        %1148 = vmatpush1.bf16.msra.mxu0 0
        %1149 = vmatprep.subr.bf16.mxu0 0
        %1150 = vmatpush1.bf16.msra.mxu0 0
        %1151 = vmatprep.subr.bf16.mxu0 0
        %1152 = vmatpush1.bf16.msra.mxu0 0
        %1153 = vmatprep.subr.bf16.mxu0 0
        %1154 = vmatpush1.bf16.msra.mxu0 0
        %1155 = vmatprep.subr.bf16.mxu0 0
        %1156 = vmatpush1.bf16.msra.mxu0 %v1140
        %1157 = vmatprep.subr.bf16.mxu0 0
        %1158 = vmatpush1.bf16.msra.mxu0 %v1139
        %1159 = vmatprep.subr.bf16.mxu0 0
        %1160 = vmatpush2.bf16.msra.mxu0 0
        %1161 = vmatprep.subr.bf16.mxu0 0
        %1162 = vmatpush2.bf16.msra.mxu0 0
        %1163 = vmatprep.subr.bf16.mxu0 0
        %1164 = vmatpush2.bf16.msra.mxu0 0
        %1165 = vmatprep.subr.bf16.mxu0 0
        %1166 = vmatpush2.bf16.msra.mxu0 0
        %1167 = vmatprep.subr.bf16.mxu0 0
        %1168 = vmatpush2.bf16.msra.mxu0 0
        %1169 = vmatprep.subr.bf16.mxu0 0
        %1170 = vmatpush2.bf16.msra.mxu0 0
        %1171 = vmatprep.subr.bf16.mxu0 0
        %1172 = vmatpush2.bf16.msra.mxu0 0
        %1173 = vmatprep.subr.bf16.mxu0 0
        %1174 = vmatpush2.bf16.msra.mxu0 0
        %1175 = vmatprep.mubr.bf16.mxu0 0
        %1176 = vmatmul.mubr.bf16.gmra.mxu0 %v402
        %v1177 = vpop.f32.mrf.mxu0
        %v1178 = vadd.f32 %v1129, %v1177
        %v1179 = vpop.f32.mrf.mxu0
        %v1180 = vpop.f32.mrf.mxu0
        %v1181 = vpop.f32.mrf.mxu0
        %1182 = vdwg.mxu0
        %v1183 = vmul.f32 %v1048, 0.35355338
        %v1184 = vpack.c.bf16 %v1183, %v1183
        %s1185 = scalar_lea.vmem %s353, 12 [#allocation2]
        %1186 = vst.msk [vmem:[%s1185] sm:$0xf] %vm572, %v1184
        %v1187 = vpack.c.bf16 %v1113, %v1113
        %s1188 = scalar_lea.vmem %s360, 12 [#allocation4]
        %1189 = vst.msk [vmem:[%s1188] sm:$0xf] %vm572, %v1187
        %v1190 = vpack.c.bf16 %v1178, %v1178
        %s1191 = scalar_lea.vmem %s367, 12 [#allocation6]
        %1192 = vst.msk [vmem:[%s1191] sm:$0xf] %vm572, %v1190
        %s1193 = sand.u32 %s203, 1
        %s1194 = scalar_lea.sflag [#allocation3], %s1193
        %s1195 = sand.u32 %s203, 1
        %s1196 = smul.addr %s1195, 16
        %s1197 = scalar_lea.vmem [#allocation2], %s1196
        %s1198 = sand.u32 %s27, 1
        %s1199 = scalar_lea.sflag [#allocation5], %s1198
        %s1200 = sand.u32 %s231, 1
        %s1201 = smul.addr %s1200, 16
        %s1202 = scalar_lea.vmem [#allocation4], %s1201
        %s1203 = sand.u32 %s27, 1
        %s1204 = scalar_lea.sflag [#allocation5], %s1203
        %s1205 = sand.u32 %s259, 1
        %s1206 = smul.addr %s1205, 16
        %s1207 = scalar_lea.vmem [#allocation6], %s1206
        // Predicated region
        $region49: #{tpu_custom_call.1} parent=47 // pred_check
          %p1208 = pneg %p213
        $region50: #{tpu_custom_call.1} parent=47 // pred_check_branch
          %1210 = sbr.rel (%p1208) target = $region52
        $region51: #{tpu_custom_call.1} parent=47 // pred_region
          %s1212 = ssub.s32 256, 256
          %1213 = vsyncadd %s1194, %s1212
          %s1214 = smul.addr %s31, 4
          %s1215 = sadd.s32 %s32, %s1214
          %s1216 = smul.addr %s1215, 64
          %s1217 = scalar_lea.hbm %s7, %s1216
          %s1218 = sshll.u32 %s1197, 4
          %s1219 = int_to_ptr.vmem [resolvable:$true] %s1218
          %1224 = dma.vmem_to_hbm [thread:$0]  %s1219, 256, %s1217, %s1194, 64, 64, 4
        $region52: #{tpu_custom_call.1} parent=47 // pred_fallthru
          _
        // Predicated region
        $region53: #{tpu_custom_call.1} parent=47 // pred_check
          %p1225 = pneg %p241
        $region54: #{tpu_custom_call.1} parent=47 // pred_check_branch
          %1227 = sbr.rel (%p1225) target = $region56
        $region55: #{tpu_custom_call.1} parent=47 // pred_region
          %s1229 = ssub.s32 256, 256
          %1230 = vsyncadd %s1199, %s1229
          %s1231 = smul.addr %s31, 4
          %s1232 = sadd.s32 %s32, %s1231
          %s1233 = smul.addr %s1232, 64
          %s1234 = scalar_lea.hbm %s8, %s1233
          %s1235 = sshll.u32 %s1202, 4
          %s1236 = int_to_ptr.vmem [resolvable:$true] %s1235
          %1241 = dma.vmem_to_hbm [thread:$0]  %s1236, 256, %s1234, %s1199, 64, 64, 4
        $region56: #{tpu_custom_call.1} parent=47 // pred_fallthru
          _
        // Predicated region
        $region57: #{tpu_custom_call.1} parent=47 // pred_check
          %p1242 = pneg %p269
        $region58: #{tpu_custom_call.1} parent=47 // pred_check_branch
          %1244 = sbr.rel (%p1242) target = $region60
        $region59: #{tpu_custom_call.1} parent=47 // pred_region
          %s1246 = ssub.s32 256, 256
          %1247 = vsyncadd %s1204, %s1246
          %s1248 = smul.addr %s31, 4
          %s1249 = sadd.s32 %s32, %s1248
          %s1250 = smul.addr %s1249, 64
          %s1251 = scalar_lea.hbm %s9, %s1250
          %s1252 = sshll.u32 %s1207, 4
          %s1253 = int_to_ptr.vmem [resolvable:$true] %s1252
          %1258 = dma.vmem_to_hbm [thread:$0]  %s1253, 256, %s1251, %s1204, 64, 64, 4
        $region60: #{tpu_custom_call.1} parent=47 // pred_fallthru
          _
      $region48: #{tpu_custom_call.1} parent=5 // pred_fallthru
        _
      %p1259 = scmp.le.s32.totalorder 2, %s22
      // Predicated region
      $region61: #{tpu_custom_call.1} parent=5 // pred_check
        %p1260 = pneg %p1259
      $region62: #{tpu_custom_call.1} parent=5 // pred_check_branch
        %1262 = sbr.rel (%p1260) target = $region64
      $region63: #{tpu_custom_call.1} parent=5 // pred_region
        %s1263 = ssub.s32 %s22, 2
        // Predicated region
        $region65: #{tpu_custom_call.1} parent=63 // pred_check
          %p1264 = pneg %p219
        $region66: #{tpu_custom_call.1} parent=63 // pred_check_branch
          %1266 = sbr.rel (%p1264) target = $region68
        $region67: #{tpu_custom_call.1} parent=63 // pred_region
          %s1267 = sand.u32 %s204, 1
          %s1268 = scalar_lea.sflag [#allocation3], %s1267
          %s1269 = sand.u32 %s204, 1
          %s1270 = smul.addr %s1269, 16
          %s1271 = scalar_lea.vmem [#allocation2], %s1270
          %1272 = dma.done %s1268, 256
        $region68: #{tpu_custom_call.1} parent=63 // pred_fallthru
          _
        // Predicated region
        $region69: #{tpu_custom_call.1} parent=63 // pred_check
          %p1273 = pneg %p247
        $region70: #{tpu_custom_call.1} parent=63 // pred_check_branch
          %1275 = sbr.rel (%p1273) target = $region72
        $region71: #{tpu_custom_call.1} parent=63 // pred_region
          %s1276 = sand.u32 %s28, 1
          %s1277 = scalar_lea.sflag [#allocation5], %s1276
          %s1278 = sand.u32 %s232, 1
          %s1279 = smul.addr %s1278, 16
          %s1280 = scalar_lea.vmem [#allocation4], %s1279
          %1281 = dma.done %s1277, 256
        $region72: #{tpu_custom_call.1} parent=63 // pred_fallthru
          _
        // Predicated region
        $region73: #{tpu_custom_call.1} parent=63 // pred_check
          %p1282 = pneg %p275
        $region74: #{tpu_custom_call.1} parent=63 // pred_check_branch
          %1284 = sbr.rel (%p1282) target = $region76
        $region75: #{tpu_custom_call.1} parent=63 // pred_region
          %s1285 = sand.u32 %s28, 1
          %s1286 = scalar_lea.sflag [#allocation5], %s1285
          %s1287 = sand.u32 %s260, 1
          %s1288 = smul.addr %s1287, 16
          %s1289 = scalar_lea.vmem [#allocation6], %s1288
          %1290 = dma.done %s1286, 256
        $region76: #{tpu_custom_call.1} parent=63 // pred_fallthru
          _
      $region64: #{tpu_custom_call.1} parent=5 // pred_fallthru
        _
    $region6: #{tpu_custom_call.1} parent=1 // loop_footer
      %s26 = sadd.s32 1, %s22
    $region7: #{tpu_custom_call.1} parent=1 // loop_footer_branch
      %21 = sbr.rel target = $region3
    $region8: #{tpu_custom_call.1} parent=1 // loop_exit
      _
    %1291 = vsyncpa [#allocation3], 1
    %s1292 = scalar_lea.sflag [#allocation3], 1
    %1293 = vsyncpa %s1292, 1
    %1294 = vsyncpa [#allocation5], 1
    %s1295 = scalar_lea.sflag [#allocation5], 1
    %1296 = vsyncpa %s1295, 1

</llo_original>
